<compile_context>
chip_gen: v6e
topology: v6e:2x2x1
jax: 0.10.0
libtpu: 0.0.40
codegen_flags: <defaults>
</compile_context>

<pallas_src>
import functools

import jax
import jax.numpy as jnp
from jax.experimental import pallas as pl
from jax.experimental.pallas import tpu as pltpu


# ---------------------------------------------------------------------------
# Pass A / B kernel: (optional folded-BN affine + ReLU) -> Conv1d -> BN stats.
# One batch row per grid step; stats accumulate across the grid.
# ---------------------------------------------------------------------------
def _conv_bn_stats_kernel(x_ref, scale_ref, shift_ref, w_ref,
                          y_ref, sum_ref, ssq_ref, *, K, apply_pre_bn_relu):
  # x_ref:     (Cin, L)      f32  activation tile (batch dim squeezed)
  # scale_ref: (Cin, 1)      f32  folded BN scale (unused when apply_pre off)
  # shift_ref: (Cin, 1)      f32  folded BN shift
  # w_ref:     (Cout, K*Cin) bf16 tap-major packed conv weight
  # y_ref:     (Cout, L)     f32  conv output tile (lane-dense store)
  # sum_ref:   (Cout, 1)     f32  running per-channel sum   (grid-resident)
  # ssq_ref:   (Cout, 1)     f32  running per-channel sumsq (grid-resident)
  n = pl.program_id(0)

  v = x_ref[...].astype(jnp.float32)                          # (Cin, L)
  if apply_pre_bn_relu:
    # Previous BN folded to a single FMA, then ReLU (all f32 on the VPU).
    v = jnp.maximum(v * scale_ref[...] + shift_ref[...], 0.0)

  Cin, L = v.shape
  pad = K // 2
  lane = jax.lax.broadcasted_iota(jnp.int32, (Cin, L), 1)

  # Conv taps without a zero-padded copy and without unaligned lane slices:
  # tap d satisfies s_d[:, j] = v[:, j + d], zero when j + d is outside
  # [0, L) ('same' zero padding) -> XLU roll + iota edge mask.
  taps = []
  for k in range(K):
    d = k - pad
    if d == 0:
      taps.append(v)
    else:
      rolled = pltpu.roll(v, (-d) % L, axis=1)                # rolled[j]=v[j+d]
      valid = (lane + d >= 0) & (lane + d < L)
      taps.append(jnp.where(valid, rolled, 0.0))
  cat = jnp.concatenate(taps, axis=0).astype(jnp.bfloat16)    # (K*Cin, L)

  # Single 2-D MXU matmul per tile: bf16 operands, f32 accumulation,
  # lane dimension = L (lane-dense).
  y = jnp.dot(w_ref[...], cat, preferred_element_type=jnp.float32)

  y_ref[...] = y.astype(y_ref.dtype)

  # Per-channel batch statistics accumulated across the (arbitrary) grid axis.
  @pl.when(n == 0)
  def _init():
    sum_ref[...] = jnp.zeros_like(sum_ref)
    ssq_ref[...] = jnp.zeros_like(ssq_ref)

  sum_ref[...] += jnp.sum(y, axis=1, keepdims=True)
  ssq_ref[...] += jnp.sum(y * y, axis=1, keepdims=True)


def _conv_pass(x, w_packed, scale, shift, *, K, apply_pre_bn_relu, vmem_limit):
  N, Cin, L = x.shape
  Cout = w_packed.shape[0]
  kernel = functools.partial(_conv_bn_stats_kernel, K=K,
                             apply_pre_bn_relu=apply_pre_bn_relu)
  return pl.pallas_call(
      kernel,
      grid=(N,),
      in_specs=[
          pl.BlockSpec((None, Cin, L), lambda n: (n, 0, 0)),   # activations
          pl.BlockSpec((Cin, 1), lambda n: (0, 0)),            # folded BN scale
          pl.BlockSpec((Cin, 1), lambda n: (0, 0)),            # folded BN shift
          pl.BlockSpec((Cout, K * Cin), lambda n: (0, 0)),     # packed weights
      ],
      out_specs=(
          pl.BlockSpec((None, Cout, L), lambda n: (n, 0, 0)),  # conv output
          pl.BlockSpec((Cout, 1), lambda n: (0, 0)),           # sum  (accum)
          pl.BlockSpec((Cout, 1), lambda n: (0, 0)),           # ssq  (accum)
      ),
      out_shape=(
          jax.ShapeDtypeStruct((N, Cout, L), jnp.float32),
          jax.ShapeDtypeStruct((Cout, 1), jnp.float32),
          jax.ShapeDtypeStruct((Cout, 1), jnp.float32),
      ),
      compiler_params=pltpu.CompilerParams(
          # Stats accumulate in grid-resident output blocks -> sequential axis.
          dimension_semantics=("arbitrary",),
          # Safe on every generation's scoped default (v7x physical is 64 MiB,
          # scoped 32 MiB); demo working set is a few hundred KiB.
          vmem_limit_bytes=vmem_limit,
      ),
  )(x, scale, shift, w_packed)


# ---------------------------------------------------------------------------
# Pass C kernel: BN2 affine + ReLU + identity residual (elementwise).
# ---------------------------------------------------------------------------
def _bn_relu_residual_kernel(y_ref, x_ref, scale_ref, shift_ref, o_ref):
  y = y_ref[...].astype(jnp.float32)
  x = x_ref[...].astype(jnp.float32)
  # Module semantics: ReLU first, THEN add the identity.
  out = jnp.maximum(y * scale_ref[...] + shift_ref[...], 0.0) + x
  o_ref[...] = out.astype(o_ref.dtype)


def _finalize_pass(y, x, scale, shift, *, l_tile, vmem_limit):
  N, C, L = x.shape
  return pl.pallas_call(
      _bn_relu_residual_kernel,
      grid=(N, L // l_tile),
      in_specs=[
          pl.BlockSpec((None, C, l_tile), lambda n, l: (n, 0, l)),
          pl.BlockSpec((None, C, l_tile), lambda n, l: (n, 0, l)),
          pl.BlockSpec((C, 1), lambda n, l: (0, 0)),
          pl.BlockSpec((C, 1), lambda n, l: (0, 0)),
      ],
      out_specs=pl.BlockSpec((None, C, l_tile), lambda n, l: (n, 0, l)),
      out_shape=jax.ShapeDtypeStruct((N, C, L), x.dtype),
      compiler_params=pltpu.CompilerParams(
          # Fully independent tiles: shard across v7x's 2 TensorCores.
          dimension_semantics=("parallel", "parallel"),
          vmem_limit_bytes=vmem_limit,
      ),
  )(y, x, scale, shift)


def _bn_affine(s, ss, gamma, beta, count, eps):
  """Fold training-mode BN into per-channel scale/shift. Tiny (C,1) JAX glue."""
  mean = s / count
  var = jnp.maximum(ss / count - mean * mean, 0.0)   # clamp: cancellation
  scale = gamma.reshape(-1, 1).astype(jnp.float32) * jax.lax.rsqrt(var + eps)
  shift = beta.reshape(-1, 1).astype(jnp.float32) - mean * scale
  return scale, shift


def _pick_l_tile(L, target=512):
  """Lane-dense finalize tile: a multiple of 128 dividing L, close to
  `target` (>=512 per the roofline measurements); full L for ragged lengths."""
  if L % 128 != 0 or L <= target:
    return L
  for t in range(target, 127, -128):
    if L % t == 0:
      return t
  return L


def basic_block(x, w1, g1, b1, w2, g2, b2, *, eps=1e-5,
                vmem_limit=32 * 1024 * 1024):
  """BasicBlock forward (training-mode BN, downsample=None), NCL layout.

  x:  (N, C, L) float32 (PyTorch NCL layout, L on the lane axis).
  w*: (Cout, Cin, K) Conv1d weights (bias=False);  g*, b*: (Cout,) BN affine.
  """
  N, Cin, L = x.shape
  Cout, _, K1 = w1.shape
  K2 = w2.shape[2]
  assert Cin == Cout, "downsample=None requires in_channels == out_channels"
  assert K1 % 2 == 1 and K2 % 2 == 1, "'same' residual conv needs odd kernels"
  # TODO(synk): eval-mode BN (running_mean/var) and the optional `downsample`
  # module are not implemented (module default: training mode, downsample=None).

  # Conv weights packed tap-major (Cout, K*Cin), bf16 for the MXU (tiny).
  w1c = jnp.transpose(w1, (0, 2, 1)).reshape(Cout, K1 * Cin).astype(jnp.bfloat16)
  w2c = jnp.transpose(w2, (0, 2, 1)).reshape(Cout, K2 * Cout).astype(jnp.bfloat16)

  ones = jnp.ones((Cin, 1), jnp.float32)
  zeros = jnp.zeros((Cin, 1), jnp.float32)
  count = float(N * L)                       # biased batch stats over N and L

  # Pass A: conv1 + BN1 sum/sumsq (identity pre-activation).
  h1, s1, ss1 = _conv_pass(x, w1c, ones, zeros, K=K1,
                           apply_pre_bn_relu=False, vmem_limit=vmem_limit)
  scale1, shift1 = _bn_affine(s1, ss1, g1, b1, count, eps)

  # Pass B: BN1 affine + ReLU + conv2 + BN2 sum/sumsq.
  h2, s2, ss2 = _conv_pass(h1, w2c, scale1, shift1, K=K2,
                           apply_pre_bn_relu=True, vmem_limit=vmem_limit)
  scale2, shift2 = _bn_affine(s2, ss2, g2, b2, count, eps)

  # Pass C: BN2 affine + ReLU + residual add (x re-read here, not kept live).
  return _finalize_pass(h2, x, scale2, shift2,
                        l_tile=_pick_l_tile(L), vmem_limit=vmem_limit)


def _reference(x, w1, g1, b1, w2, g2, b2, eps=1e-5):
  """Pure-JAX f32 reference (NCL layout, training-mode BN, ReLU then +id)."""
  def conv1d(inp, w):                      # inp (N,Ci,L), w (Co,Ci,K)
    K = w.shape[2]
    pad = K // 2
    L = inp.shape[2]
    xp = jnp.pad(inp, ((0, 0), (0, 0), (pad, pad)))
    return sum(jnp.einsum('ncl,oc->nol', xp[:, :, k:k + L], w[:, :, k])
               for k in range(K))

  def bn(inp, g, b):                       # inp (N,C,L)
    m = jnp.mean(inp, axis=(0, 2), keepdims=True)
    v = jnp.mean((inp - m) ** 2, axis=(0, 2), keepdims=True)
    return (inp - m) * jax.lax.rsqrt(v + eps) * g[None, :, None] + b[None, :, None]

  out = jax.nn.relu(bn(conv1d(x, w1), g1, b1))
  out = jax.nn.relu(bn(conv1d(out, w2), g2, b2))
  return out + x


if __name__ == "__main__":
  # Small shapes, but with L a multiple of 128 so the gridded, lane-dense
  # tiling path is actually exercised (finalize grid = (N, L // 512)).
  N, C, L = 2, 4, 1024           # in_channels == out_channels (no downsample)
  K1, K2 = 3, 3

  key = jax.random.PRNGKey(0)
  kx, kw1, kw2, kg1, kb1, kg2, kb2 = jax.random.split(key, 7)
  x = jax.random.normal(kx, (N, C, L), dtype=jnp.float32)
  w1 = jax.random.normal(kw1, (C, C, K1), dtype=jnp.float32) * 0.1
  w2 = jax.random.normal(kw2, (C, C, K2), dtype=jnp.float32) * 0.1
  g1 = 1.0 + 0.1 * jax.random.normal(kg1, (C,), dtype=jnp.float32)
  b1 = 0.1 * jax.random.normal(kb1, (C,), dtype=jnp.float32)
  g2 = 1.0 + 0.1 * jax.random.normal(kg2, (C,), dtype=jnp.float32)
  b2 = 0.1 * jax.random.normal(kb2, (C,), dtype=jnp.float32)

  out = jax.block_until_ready(
      jax.jit(basic_block)(x, w1, g1, b1, w2, g2, b2))
  ref = _reference(x, w1, g1, b1, w2, g2, b2)

  assert out.shape == (N, C, L)
  # bf16 MXU operands (f32 accumulate) vs the f32 reference -> loose-ish tol.
  assert jnp.allclose(out, ref, atol=3e-2, rtol=3e-2), (
      "max abs err = %f" % float(jnp.max(jnp.abs(out - ref))))

  print("KERNEL_OK")
</pallas_src>

<mosaic_0001>
module attributes {stable_mosaic.version = 11 : i64} {
  func.func @_conv_bn_stats_kernel(%arg0: i32, %arg1: memref<1x4x1024xf32, #tpu.memory_space<vmem>>, %arg2: memref<4x1xf32, #tpu.memory_space<vmem>>, %arg3: memref<4x1xf32, #tpu.memory_space<vmem>>, %arg4: memref<4x12xbf16, #tpu.memory_space<vmem>>, %arg5: memref<1x4x1024xf32, #tpu.memory_space<vmem>>, %arg6: memref<4x1xf32, #tpu.memory_space<vmem>>, %arg7: memref<4x1xf32, #tpu.memory_space<vmem>>) attributes {dimension_semantics = [#tpu.dimension_semantics<arbitrary>], iteration_bounds = array<i64: 2>, scalar_prefetch = 0 : i64, scratch_operands = 0 : i64, tpu.core_type = #tpu.core_type<tc>, window_params = [{transform_indices = @transform_0, window_bounds = array<i64: 1, 4, 1024>}, {pipeline_mode = #tpu.pipeline_mode<synchronous>, transform_indices = @transform_1, window_bounds = array<i64: 4, 1>}, {pipeline_mode = #tpu.pipeline_mode<synchronous>, transform_indices = @transform_2, window_bounds = array<i64: 4, 1>}, {pipeline_mode = #tpu.pipeline_mode<synchronous>, transform_indices = @transform_3, window_bounds = array<i64: 4, 12>}, {transform_indices = @transform_4, window_bounds = array<i64: 1, 4, 1024>}, {pipeline_mode = #tpu.pipeline_mode<synchronous>, transform_indices = @transform_5, window_bounds = array<i64: 4, 1>}, {pipeline_mode = #tpu.pipeline_mode<synchronous>, transform_indices = @transform_6, window_bounds = array<i64: 4, 1>}]} {
    %c0 = arith.constant 0 : index
    %c0_0 = arith.constant 0 : index
    %c0_1 = arith.constant 0 : index
    %0 = vector.load %arg1[%c0, %c0_0, %c0_1] : memref<1x4x1024xf32, #tpu.memory_space<vmem>>, vector<1x4x1024xf32>
    %1 = vector.shape_cast %0 : vector<1x4x1024xf32> to vector<4x1024xf32>
    %2 = tpu.iota {dimensions = array<i32: 1>} : vector<4x1024xi32>
    %c1_i32 = arith.constant 1 : i32
    %3 = tpu.dynamic_rotate %1 by %c1_i32 dim 1 : vector<4x1024xf32>, i32 -> vector<4x1024xf32>
    %c-1_i32 = arith.constant -1 : i32
    %4 = vector.broadcast %c-1_i32 : i32 to vector<4x1024xi32>
    %5 = arith.addi %2, %4 : vector<4x1024xi32>
    %c0_i32 = arith.constant 0 : i32
    %6 = vector.broadcast %c0_i32 : i32 to vector<4x1024xi32>
    %7 = arith.cmpi sge, %5, %6 : vector<4x1024xi32>
    %c-1_i32_2 = arith.constant -1 : i32
    %8 = vector.broadcast %c-1_i32_2 : i32 to vector<4x1024xi32>
    %9 = arith.addi %2, %8 : vector<4x1024xi32>
    %c1024_i32 = arith.constant 1024 : i32
    %10 = vector.broadcast %c1024_i32 : i32 to vector<4x1024xi32>
    %11 = arith.cmpi slt, %9, %10 : vector<4x1024xi32>
    %12 = arith.andi %7, %11 : vector<4x1024xi1>
    %cst = arith.constant 0.000000e+00 : f32
    %13 = vector.broadcast %cst : f32 to vector<4x1024xf32>
    %14 = arith.select %12, %3, %13 : vector<4x1024xi1>, vector<4x1024xf32>
    %c1023_i32 = arith.constant 1023 : i32
    %15 = tpu.dynamic_rotate %1 by %c1023_i32 dim 1 : vector<4x1024xf32>, i32 -> vector<4x1024xf32>
    %c1_i32_3 = arith.constant 1 : i32
    %16 = vector.broadcast %c1_i32_3 : i32 to vector<4x1024xi32>
    %17 = arith.addi %2, %16 : vector<4x1024xi32>
    %c0_i32_4 = arith.constant 0 : i32
    %18 = vector.broadcast %c0_i32_4 : i32 to vector<4x1024xi32>
    %19 = arith.cmpi sge, %17, %18 : vector<4x1024xi32>
    %c1_i32_5 = arith.constant 1 : i32
    %20 = vector.broadcast %c1_i32_5 : i32 to vector<4x1024xi32>
    %21 = arith.addi %2, %20 : vector<4x1024xi32>
    %c1024_i32_6 = arith.constant 1024 : i32
    %22 = vector.broadcast %c1024_i32_6 : i32 to vector<4x1024xi32>
    %23 = arith.cmpi slt, %21, %22 : vector<4x1024xi32>
    %24 = arith.andi %19, %23 : vector<4x1024xi1>
    %cst_7 = arith.constant 0.000000e+00 : f32
    %25 = vector.broadcast %cst_7 : f32 to vector<4x1024xf32>
    %26 = arith.select %24, %15, %25 : vector<4x1024xi1>, vector<4x1024xf32>
    %27 = tpu.concatenate %14, %1, %26 in 0 : vector<4x1024xf32>, vector<4x1024xf32>, vector<4x1024xf32> -> vector<12x1024xf32>
    %28 = arith.truncf %27 : vector<12x1024xf32> to vector<12x1024xbf16>
    %c0_8 = arith.constant 0 : index
    %c0_9 = arith.constant 0 : index
    %29 = vector.load %arg4[%c0_8, %c0_9] : memref<4x12xbf16, #tpu.memory_space<vmem>>, vector<4x12xbf16>
    %cst_10 = arith.constant dense<0.000000e+00> : vector<4x1024xf32>
    %30 = tpu.matmul %29, %28, %cst_10 {dimension_numbers = #tpu.dot_dimension_numbers<[1], [0], [0], [1], [0, 0, 1, 1], [], []>} : vector<4x12xbf16>, vector<12x1024xbf16>, vector<4x1024xf32> -> vector<4x1024xf32>
    %c0_11 = arith.constant 0 : index
    %c0_12 = arith.constant 0 : index
    %c0_13 = arith.constant 0 : index
    %31 = vector.load %arg5[%c0_11, %c0_12, %c0_13] : memref<1x4x1024xf32, #tpu.memory_space<vmem>>, vector<1x4x1024xf32>
    %32 = vector.shape_cast %31 : vector<1x4x1024xf32> to vector<4x1024xf32>
    %33 = vector.shape_cast %30 : vector<4x1024xf32> to vector<1x4x1024xf32>
    tpu.vector_store %arg5[%c0_11, %c0_12, %c0_13], %33 {strides = array<i32>} : memref<1x4x1024xf32, #tpu.memory_space<vmem>>, vector<1x4x1024xf32>,
    %c0_i32_14 = arith.constant 0 : i32
    %34 = arith.cmpi eq, %arg0, %c0_i32_14 : i32
    %35 = arith.extui %34 : i1 to i32
    %c0_i32_15 = arith.constant 0 : i32
    %36 = arith.cmpi ne, %35, %c0_i32_15 : i32
    scf.if %36 {
      %cst_26 = arith.constant 0.000000e+00 : f32
      %48 = vector.broadcast %cst_26 : f32 to vector<4x1xf32>
      %c0_27 = arith.constant 0 : index
      %c0_28 = arith.constant 0 : index
      %49 = vector.load %arg6[%c0_27, %c0_28] : memref<4x1xf32, #tpu.memory_space<vmem>>, vector<4x1xf32>
      tpu.vector_store %arg6[%c0_27, %c0_28], %48 {strides = array<i32>} : memref<4x1xf32, #tpu.memory_space<vmem>>, vector<4x1xf32>,
      %cst_29 = arith.constant 0.000000e+00 : f32
      %50 = vector.broadcast %cst_29 : f32 to vector<4x1xf32>
      %c0_30 = arith.constant 0 : index
      %c0_31 = arith.constant 0 : index
      %51 = vector.load %arg7[%c0_30, %c0_31] : memref<4x1xf32, #tpu.memory_space<vmem>>, vector<4x1xf32>
      tpu.vector_store %arg7[%c0_30, %c0_31], %50 {strides = array<i32>} : memref<4x1xf32, #tpu.memory_space<vmem>>, vector<4x1xf32>,
    } else {
    }
    %c0_16 = arith.constant 0 : index
    %c0_17 = arith.constant 0 : index
    %37 = vector.load %arg6[%c0_16, %c0_17] : memref<4x1xf32, #tpu.memory_space<vmem>>, vector<4x1xf32>
    %cst_18 = arith.constant dense<0.000000e+00> : vector<4xf32>
    %38 = vector.multi_reduction <add>, %30, %cst_18 [1] : vector<4x1024xf32> to vector<4xf32>
    %39 = vector.shape_cast %38 : vector<4xf32> to vector<4x1xf32>
    %40 = arith.addf %37, %39 : vector<4x1xf32>
    %c0_19 = arith.constant 0 : index
    %c0_20 = arith.constant 0 : index
    %41 = vector.load %arg6[%c0_19, %c0_20] : memref<4x1xf32, #tpu.memory_space<vmem>>, vector<4x1xf32>
    tpu.vector_store %arg6[%c0_19, %c0_20], %40 {strides = array<i32>} : memref<4x1xf32, #tpu.memory_space<vmem>>, vector<4x1xf32>,
    %c0_21 = arith.constant 0 : index
    %c0_22 = arith.constant 0 : index
    %42 = vector.load %arg7[%c0_21, %c0_22] : memref<4x1xf32, #tpu.memory_space<vmem>>, vector<4x1xf32>
    %43 = arith.mulf %30, %30 : vector<4x1024xf32>
    %cst_23 = arith.constant dense<0.000000e+00> : vector<4xf32>
    %44 = vector.multi_reduction <add>, %43, %cst_23 [1] : vector<4x1024xf32> to vector<4xf32>
    %45 = vector.shape_cast %44 : vector<4xf32> to vector<4x1xf32>
    %46 = arith.addf %42, %45 : vector<4x1xf32>
    %c0_24 = arith.constant 0 : index
    %c0_25 = arith.constant 0 : index
    %47 = vector.load %arg7[%c0_24, %c0_25] : memref<4x1xf32, #tpu.memory_space<vmem>>, vector<4x1xf32>
    tpu.vector_store %arg7[%c0_24, %c0_25], %46 {strides = array<i32>} : memref<4x1xf32, #tpu.memory_space<vmem>>, vector<4x1xf32>,
    return
  }
  func.func @transform_0(%arg0: i32) -> (i32, i32, i32) {
    %c0_i32 = arith.constant 0 : i32
    %c0_i32_0 = arith.constant 0 : i32
    %c0_i32_1 = arith.constant 0 : i32
    return %arg0, %c0_i32, %c0_i32_0 : i32, i32, i32
  }
  func.func @transform_1(%arg0: i32) -> (i32, i32) {
    %c0_i32 = arith.constant 0 : i32
    %c0_i32_0 = arith.constant 0 : i32
    %c0_i32_1 = arith.constant 0 : i32
    return %c0_i32, %c0_i32_0 : i32, i32
  }
  func.func @transform_2(%arg0: i32) -> (i32, i32) {
    %c0_i32 = arith.constant 0 : i32
    %c0_i32_0 = arith.constant 0 : i32
    %c0_i32_1 = arith.constant 0 : i32
    return %c0_i32, %c0_i32_0 : i32, i32
  }
  func.func @transform_3(%arg0: i32) -> (i32, i32) {
    %c0_i32 = arith.constant 0 : i32
    %c0_i32_0 = arith.constant 0 : i32
    %c0_i32_1 = arith.constant 0 : i32
    return %c0_i32, %c0_i32_0 : i32, i32
  }
  func.func @transform_4(%arg0: i32) -> (i32, i32, i32) {
    %c0_i32 = arith.constant 0 : i32
    %c0_i32_0 = arith.constant 0 : i32
    %c0_i32_1 = arith.constant 0 : i32
    return %arg0, %c0_i32, %c0_i32_0 : i32, i32, i32
  }
  func.func @transform_5(%arg0: i32) -> (i32, i32) {
    %c0_i32 = arith.constant 0 : i32
    %c0_i32_0 = arith.constant 0 : i32
    %c0_i32_1 = arith.constant 0 : i32
    return %c0_i32, %c0_i32_0 : i32, i32
  }
  func.func @transform_6(%arg0: i32) -> (i32, i32) {
    %c0_i32 = arith.constant 0 : i32
    %c0_i32_0 = arith.constant 0 : i32
    %c0_i32_1 = arith.constant 0 : i32
    return %c0_i32, %c0_i32_0 : i32, i32
  }
}

module attributes {stable_mosaic.version = 11 : i64} {
  func.func @_bn_relu_residual_kernel(%arg0: i32, %arg1: i32, %arg2: memref<1x4x512xf32, #tpu.memory_space<vmem>>, %arg3: memref<1x4x512xf32, #tpu.memory_space<vmem>>, %arg4: memref<4x1xf32, #tpu.memory_space<vmem>>, %arg5: memref<4x1xf32, #tpu.memory_space<vmem>>, %arg6: memref<1x4x512xf32, #tpu.memory_space<vmem>>) attributes {dimension_semantics = [#tpu.dimension_semantics<parallel>, #tpu.dimension_semantics<parallel>], iteration_bounds = array<i64: 2, 2>, scalar_prefetch = 0 : i64, scratch_operands = 0 : i64, tpu.core_type = #tpu.core_type<tc>, window_params = [{transform_indices = @transform_0, window_bounds = array<i64: 1, 4, 512>}, {transform_indices = @transform_1, window_bounds = array<i64: 1, 4, 512>}, {pipeline_mode = #tpu.pipeline_mode<synchronous>, transform_indices = @transform_2, window_bounds = array<i64: 4, 1>}, {pipeline_mode = #tpu.pipeline_mode<synchronous>, transform_indices = @transform_3, window_bounds = array<i64: 4, 1>}, {transform_indices = @transform_4, window_bounds = array<i64: 1, 4, 512>}]} {
    %c0 = arith.constant 0 : index
    %c0_0 = arith.constant 0 : index
    %c0_1 = arith.constant 0 : index
    %0 = vector.load %arg2[%c0, %c0_0, %c0_1] : memref<1x4x512xf32, #tpu.memory_space<vmem>>, vector<1x4x512xf32>
    %1 = vector.shape_cast %0 : vector<1x4x512xf32> to vector<4x512xf32>
    %c0_2 = arith.constant 0 : index
    %c0_3 = arith.constant 0 : index
    %c0_4 = arith.constant 0 : index
    %2 = vector.load %arg3[%c0_2, %c0_3, %c0_4] : memref<1x4x512xf32, #tpu.memory_space<vmem>>, vector<1x4x512xf32>
    %3 = vector.shape_cast %2 : vector<1x4x512xf32> to vector<4x512xf32>
    %c0_5 = arith.constant 0 : index
    %c0_6 = arith.constant 0 : index
    %4 = vector.load %arg4[%c0_5, %c0_6] : memref<4x1xf32, #tpu.memory_space<vmem>>, vector<4x1xf32>
    %5 = vector.broadcast %4 : vector<4x1xf32> to vector<4x512xf32>
    %6 = arith.mulf %1, %5 : vector<4x512xf32>
    %c0_7 = arith.constant 0 : index
    %c0_8 = arith.constant 0 : index
    %7 = vector.load %arg5[%c0_7, %c0_8] : memref<4x1xf32, #tpu.memory_space<vmem>>, vector<4x1xf32>
    %8 = vector.broadcast %7 : vector<4x1xf32> to vector<4x512xf32>
    %9 = arith.addf %6, %8 : vector<4x512xf32>
    %cst = arith.constant 0.000000e+00 : f32
    %10 = vector.broadcast %cst : f32 to vector<4x512xf32>
    %11 = arith.maximumf %9, %10 : vector<4x512xf32>
    %12 = arith.addf %11, %3 : vector<4x512xf32>
    %c0_9 = arith.constant 0 : index
    %c0_10 = arith.constant 0 : index
    %c0_11 = arith.constant 0 : index
    %13 = vector.load %arg6[%c0_9, %c0_10, %c0_11] : memref<1x4x512xf32, #tpu.memory_space<vmem>>, vector<1x4x512xf32>
    %14 = vector.shape_cast %13 : vector<1x4x512xf32> to vector<4x512xf32>
    %15 = vector.shape_cast %12 : vector<4x512xf32> to vector<1x4x512xf32>
    tpu.vector_store %arg6[%c0_9, %c0_10, %c0_11], %15 {strides = array<i32>} : memref<1x4x512xf32, #tpu.memory_space<vmem>>, vector<1x4x512xf32>,
    return
  }
  func.func @transform_0(%arg0: i32, %arg1: i32) -> (i32, i32, i32) {
    %c0_i32 = arith.constant 0 : i32
    %c0_i32_0 = arith.constant 0 : i32
    return %arg0, %c0_i32, %arg1 : i32, i32, i32
  }
  func.func @transform_1(%arg0: i32, %arg1: i32) -> (i32, i32, i32) {
    %c0_i32 = arith.constant 0 : i32
    %c0_i32_0 = arith.constant 0 : i32
    return %arg0, %c0_i32, %arg1 : i32, i32, i32
  }
  func.func @transform_2(%arg0: i32, %arg1: i32) -> (i32, i32) {
    %c0_i32 = arith.constant 0 : i32
    %c0_i32_0 = arith.constant 0 : i32
    %c0_i32_1 = arith.constant 0 : i32
    return %c0_i32, %c0_i32_0 : i32, i32
  }
  func.func @transform_3(%arg0: i32, %arg1: i32) -> (i32, i32) {
    %c0_i32 = arith.constant 0 : i32
    %c0_i32_0 = arith.constant 0 : i32
    %c0_i32_1 = arith.constant 0 : i32
    return %c0_i32, %c0_i32_0 : i32, i32
  }
  func.func @transform_4(%arg0: i32, %arg1: i32) -> (i32, i32, i32) {
    %c0_i32 = arith.constant 0 : i32
    %c0_i32_0 = arith.constant 0 : i32
    return %arg0, %c0_i32, %arg1 : i32, i32, i32
  }
}

module attributes {stable_mosaic.version = 11 : i64} {
  func.func @_conv_bn_stats_kernel(%arg0: i32, %arg1: memref<1x4x1024xf32, #tpu.memory_space<vmem>>, %arg2: memref<4x1xf32, #tpu.memory_space<vmem>>, %arg3: memref<4x1xf32, #tpu.memory_space<vmem>>, %arg4: memref<4x12xbf16, #tpu.memory_space<vmem>>, %arg5: memref<1x4x1024xf32, #tpu.memory_space<vmem>>, %arg6: memref<4x1xf32, #tpu.memory_space<vmem>>, %arg7: memref<4x1xf32, #tpu.memory_space<vmem>>) attributes {dimension_semantics = [#tpu.dimension_semantics<arbitrary>], iteration_bounds = array<i64: 2>, scalar_prefetch = 0 : i64, scratch_operands = 0 : i64, tpu.core_type = #tpu.core_type<tc>, window_params = [{transform_indices = @transform_0, window_bounds = array<i64: 1, 4, 1024>}, {pipeline_mode = #tpu.pipeline_mode<synchronous>, transform_indices = @transform_1, window_bounds = array<i64: 4, 1>}, {pipeline_mode = #tpu.pipeline_mode<synchronous>, transform_indices = @transform_2, window_bounds = array<i64: 4, 1>}, {pipeline_mode = #tpu.pipeline_mode<synchronous>, transform_indices = @transform_3, window_bounds = array<i64: 4, 12>}, {transform_indices = @transform_4, window_bounds = array<i64: 1, 4, 1024>}, {pipeline_mode = #tpu.pipeline_mode<synchronous>, transform_indices = @transform_5, window_bounds = array<i64: 4, 1>}, {pipeline_mode = #tpu.pipeline_mode<synchronous>, transform_indices = @transform_6, window_bounds = array<i64: 4, 1>}]} {
    %c0 = arith.constant 0 : index
    %c0_0 = arith.constant 0 : index
    %c0_1 = arith.constant 0 : index
    %0 = vector.load %arg1[%c0, %c0_0, %c0_1] : memref<1x4x1024xf32, #tpu.memory_space<vmem>>, vector<1x4x1024xf32>
    %1 = vector.shape_cast %0 : vector<1x4x1024xf32> to vector<4x1024xf32>
    %c0_2 = arith.constant 0 : index
    %c0_3 = arith.constant 0 : index
    %2 = vector.load %arg2[%c0_2, %c0_3] : memref<4x1xf32, #tpu.memory_space<vmem>>, vector<4x1xf32>
    %3 = vector.broadcast %2 : vector<4x1xf32> to vector<4x1024xf32>
    %4 = arith.mulf %1, %3 : vector<4x1024xf32>
    %c0_4 = arith.constant 0 : index
    %c0_5 = arith.constant 0 : index
    %5 = vector.load %arg3[%c0_4, %c0_5] : memref<4x1xf32, #tpu.memory_space<vmem>>, vector<4x1xf32>
    %6 = vector.broadcast %5 : vector<4x1xf32> to vector<4x1024xf32>
    %7 = arith.addf %4, %6 : vector<4x1024xf32>
    %cst = arith.constant 0.000000e+00 : f32
    %8 = vector.broadcast %cst : f32 to vector<4x1024xf32>
    %9 = arith.maximumf %7, %8 : vector<4x1024xf32>
    %10 = tpu.iota {dimensions = array<i32: 1>} : vector<4x1024xi32>
    %c1_i32 = arith.constant 1 : i32
    %11 = tpu.dynamic_rotate %9 by %c1_i32 dim 1 : vector<4x1024xf32>, i32 -> vector<4x1024xf32>
    %c-1_i32 = arith.constant -1 : i32
    %12 = vector.broadcast %c-1_i32 : i32 to vector<4x1024xi32>
    %13 = arith.addi %10, %12 : vector<4x1024xi32>
    %c0_i32 = arith.constant 0 : i32
    %14 = vector.broadcast %c0_i32 : i32 to vector<4x1024xi32>
    %15 = arith.cmpi sge, %13, %14 : vector<4x1024xi32>
    %c-1_i32_6 = arith.constant -1 : i32
    %16 = vector.broadcast %c-1_i32_6 : i32 to vector<4x1024xi32>
    %17 = arith.addi %10, %16 : vector<4x1024xi32>
    %c1024_i32 = arith.constant 1024 : i32
    %18 = vector.broadcast %c1024_i32 : i32 to vector<4x1024xi32>
    %19 = arith.cmpi slt, %17, %18 : vector<4x1024xi32>
    %20 = arith.andi %15, %19 : vector<4x1024xi1>
    %cst_7 = arith.constant 0.000000e+00 : f32
    %21 = vector.broadcast %cst_7 : f32 to vector<4x1024xf32>
    %22 = arith.select %20, %11, %21 : vector<4x1024xi1>, vector<4x1024xf32>
    %c1023_i32 = arith.constant 1023 : i32
    %23 = tpu.dynamic_rotate %9 by %c1023_i32 dim 1 : vector<4x1024xf32>, i32 -> vector<4x1024xf32>
    %c1_i32_8 = arith.constant 1 : i32
    %24 = vector.broadcast %c1_i32_8 : i32 to vector<4x1024xi32>
    %25 = arith.addi %10, %24 : vector<4x1024xi32>
    %c0_i32_9 = arith.constant 0 : i32
    %26 = vector.broadcast %c0_i32_9 : i32 to vector<4x1024xi32>
    %27 = arith.cmpi sge, %25, %26 : vector<4x1024xi32>
    %c1_i32_10 = arith.constant 1 : i32
    %28 = vector.broadcast %c1_i32_10 : i32 to vector<4x1024xi32>
    %29 = arith.addi %10, %28 : vector<4x1024xi32>
    %c1024_i32_11 = arith.constant 1024 : i32
    %30 = vector.broadcast %c1024_i32_11 : i32 to vector<4x1024xi32>
    %31 = arith.cmpi slt, %29, %30 : vector<4x1024xi32>
    %32 = arith.andi %27, %31 : vector<4x1024xi1>
    %cst_12 = arith.constant 0.000000e+00 : f32
    %33 = vector.broadcast %cst_12 : f32 to vector<4x1024xf32>
    %34 = arith.select %32, %23, %33 : vector<4x1024xi1>, vector<4x1024xf32>
    %35 = tpu.concatenate %22, %9, %34 in 0 : vector<4x1024xf32>, vector<4x1024xf32>, vector<4x1024xf32> -> vector<12x1024xf32>
    %36 = arith.truncf %35 : vector<12x1024xf32> to vector<12x1024xbf16>
    %c0_13 = arith.constant 0 : index
    %c0_14 = arith.constant 0 : index
    %37 = vector.load %arg4[%c0_13, %c0_14] : memref<4x12xbf16, #tpu.memory_space<vmem>>, vector<4x12xbf16>
    %cst_15 = arith.constant dense<0.000000e+00> : vector<4x1024xf32>
    %38 = tpu.matmul %37, %36, %cst_15 {dimension_numbers = #tpu.dot_dimension_numbers<[1], [0], [0], [1], [0, 0, 1, 1], [], []>} : vector<4x12xbf16>, vector<12x1024xbf16>, vector<4x1024xf32> -> vector<4x1024xf32>
    %c0_16 = arith.constant 0 : index
    %c0_17 = arith.constant 0 : index
    %c0_18 = arith.constant 0 : index
    %39 = vector.load %arg5[%c0_16, %c0_17, %c0_18] : memref<1x4x1024xf32, #tpu.memory_space<vmem>>, vector<1x4x1024xf32>
    %40 = vector.shape_cast %39 : vector<1x4x1024xf32> to vector<4x1024xf32>
    %41 = vector.shape_cast %38 : vector<4x1024xf32> to vector<1x4x1024xf32>
    tpu.vector_store %arg5[%c0_16, %c0_17, %c0_18], %41 {strides = array<i32>} : memref<1x4x1024xf32, #tpu.memory_space<vmem>>, vector<1x4x1024xf32>,
    %c0_i32_19 = arith.constant 0 : i32
    %42 = arith.cmpi eq, %arg0, %c0_i32_19 : i32
    %43 = arith.extui %42 : i1 to i32
    %c0_i32_20 = arith.constant 0 : i32
    %44 = arith.cmpi ne, %43, %c0_i32_20 : i32
    scf.if %44 {
      %cst_31 = arith.constant 0.000000e+00 : f32
      %56 = vector.broadcast %cst_31 : f32 to vector<4x1xf32>
      %c0_32 = arith.constant 0 : index
      %c0_33 = arith.constant 0 : index
      %57 = vector.load %arg6[%c0_32, %c0_33] : memref<4x1xf32, #tpu.memory_space<vmem>>, vector<4x1xf32>
      tpu.vector_store %arg6[%c0_32, %c0_33], %56 {strides = array<i32>} : memref<4x1xf32, #tpu.memory_space<vmem>>, vector<4x1xf32>,
      %cst_34 = arith.constant 0.000000e+00 : f32
      %58 = vector.broadcast %cst_34 : f32 to vector<4x1xf32>
      %c0_35 = arith.constant 0 : index
      %c0_36 = arith.constant 0 : index
      %59 = vector.load %arg7[%c0_35, %c0_36] : memref<4x1xf32, #tpu.memory_space<vmem>>, vector<4x1xf32>
      tpu.vector_store %arg7[%c0_35, %c0_36], %58 {strides = array<i32>} : memref<4x1xf32, #tpu.memory_space<vmem>>, vector<4x1xf32>,
    } else {
    }
    %c0_21 = arith.constant 0 : index
    %c0_22 = arith.constant 0 : index
    %45 = vector.load %arg6[%c0_21, %c0_22] : memref<4x1xf32, #tpu.memory_space<vmem>>, vector<4x1xf32>
    %cst_23 = arith.constant dense<0.000000e+00> : vector<4xf32>
    %46 = vector.multi_reduction <add>, %38, %cst_23 [1] : vector<4x1024xf32> to vector<4xf32>
    %47 = vector.shape_cast %46 : vector<4xf32> to vector<4x1xf32>
    %48 = arith.addf %45, %47 : vector<4x1xf32>
    %c0_24 = arith.constant 0 : index
    %c0_25 = arith.constant 0 : index
    %49 = vector.load %arg6[%c0_24, %c0_25] : memref<4x1xf32, #tpu.memory_space<vmem>>, vector<4x1xf32>
    tpu.vector_store %arg6[%c0_24, %c0_25], %48 {strides = array<i32>} : memref<4x1xf32, #tpu.memory_space<vmem>>, vector<4x1xf32>,
    %c0_26 = arith.constant 0 : index
    %c0_27 = arith.constant 0 : index
    %50 = vector.load %arg7[%c0_26, %c0_27] : memref<4x1xf32, #tpu.memory_space<vmem>>, vector<4x1xf32>
    %51 = arith.mulf %38, %38 : vector<4x1024xf32>
    %cst_28 = arith.constant dense<0.000000e+00> : vector<4xf32>
    %52 = vector.multi_reduction <add>, %51, %cst_28 [1] : vector<4x1024xf32> to vector<4xf32>
    %53 = vector.shape_cast %52 : vector<4xf32> to vector<4x1xf32>
    %54 = arith.addf %50, %53 : vector<4x1xf32>
    %c0_29 = arith.constant 0 : index
    %c0_30 = arith.constant 0 : index
    %55 = vector.load %arg7[%c0_29, %c0_30] : memref<4x1xf32, #tpu.memory_space<vmem>>, vector<4x1xf32>
    tpu.vector_store %arg7[%c0_29, %c0_30], %54 {strides = array<i32>} : memref<4x1xf32, #tpu.memory_space<vmem>>, vector<4x1xf32>,
    return
  }
  func.func @transform_0(%arg0: i32) -> (i32, i32, i32) {
    %c0_i32 = arith.constant 0 : i32
    %c0_i32_0 = arith.constant 0 : i32
    %c0_i32_1 = arith.constant 0 : i32
    return %arg0, %c0_i32, %c0_i32_0 : i32, i32, i32
  }
  func.func @transform_1(%arg0: i32) -> (i32, i32) {
    %c0_i32 = arith.constant 0 : i32
    %c0_i32_0 = arith.constant 0 : i32
    %c0_i32_1 = arith.constant 0 : i32
    return %c0_i32, %c0_i32_0 : i32, i32
  }
  func.func @transform_2(%arg0: i32) -> (i32, i32) {
    %c0_i32 = arith.constant 0 : i32
    %c0_i32_0 = arith.constant 0 : i32
    %c0_i32_1 = arith.constant 0 : i32
    return %c0_i32, %c0_i32_0 : i32, i32
  }
  func.func @transform_3(%arg0: i32) -> (i32, i32) {
    %c0_i32 = arith.constant 0 : i32
    %c0_i32_0 = arith.constant 0 : i32
    %c0_i32_1 = arith.constant 0 : i32
    return %c0_i32, %c0_i32_0 : i32, i32
  }
  func.func @transform_4(%arg0: i32) -> (i32, i32, i32) {
    %c0_i32 = arith.constant 0 : i32
    %c0_i32_0 = arith.constant 0 : i32
    %c0_i32_1 = arith.constant 0 : i32
    return %arg0, %c0_i32, %c0_i32_0 : i32, i32, i32
  }
  func.func @transform_5(%arg0: i32) -> (i32, i32) {
    %c0_i32 = arith.constant 0 : i32
    %c0_i32_0 = arith.constant 0 : i32
    %c0_i32_1 = arith.constant 0 : i32
    return %c0_i32, %c0_i32_0 : i32, i32
  }
  func.func @transform_6(%arg0: i32) -> (i32, i32) {
    %c0_i32 = arith.constant 0 : i32
    %c0_i32_0 = arith.constant 0 : i32
    %c0_i32_1 = arith.constant 0 : i32
    return %c0_i32, %c0_i32_0 : i32, i32
  }
}

</mosaic_0001>

<llo_original>
// kernel: basic_block.5
$region0: #{basic_block.5}
  #allocation0 [shape = 'u32[]', space=smem, size = 0x4, offset = 0x4, fixed_abs, tag = 'smem constant byte address 0x4 - core index']
  #allocation1 [shape = 'u32[144,128]{1,0:T(1,128)}', space=vmem, size = 0x12000, scoped, tag = 'internal scratch']
  %s0 = inlined_call_operand.vmem [shape: f32[2,4,1024], index: 0, kind: input, shape index: {}]
  %s1 = inlined_call_operand.vmem [shape: f32[2,4,1024], index: 1, kind: input, shape index: {}]
  %s2 = inlined_call_operand.vmem [shape: f32[4,1], index: 2, kind: input, shape index: {}]
  %s3 = inlined_call_operand.vmem [shape: f32[4,1], index: 3, kind: input, shape index: {}]
  %s4 = inlined_call_operand.hbm [shape: f32[2,4,1024], index: 4, kind: output, shape index: {}]
  %s5 = sld [smem:[#allocation0]]
  $region49: #{basic_block.5} parent=0
    _
  %s7 = ssub.s32 1, %s5
  %s8 = scalar_select 0, %s7, %s5
  $region1: #{basic_block.5} parent=0
    #allocation2 [shape = 'u8[16384]{0}', space=vmem, size = 0x4000, scoped, tag = 'output window, operand 0']
    #allocation3 [shape = 's32[2]{0}', space=sflag, size = 0x8, scoped, tag = 'scoped memory for basic_block.5']
    %9 = vsyncpa [#allocation3], 0
    %s10 = scalar_lea.sflag [#allocation3], 1
    %11 = vsyncpa %s10, 0
    loop: start=0, step=1, limit=6
    $region2: #{basic_block.5} parent=1 // loop_pre_header
      _
    $region3: #{basic_block.5} parent=1 // loop_header
      %s13 = sphi 0, %s17
      %p14 = scmp.ge.s32.totalorder %s13, 6
      %s20 = sphi 0, %s32
      %s21 = sphi 0, %s28
      %s22 = sphi 0, %s20
      %s23 = sphi 0, %s21
      %s24 = sphi 0, %s22
      %s25 = sphi 0, %s23
      %s37 = sphi 0, %s39
      %s40 = sphi 0, %s37
      %s41 = sphi 0, %s40
      %s57 = sphi 0, %s41
      %s65 = sphi 0, %s67
      %s68 = sphi 0, %s65
      %s69 = sphi 0, %s68
      %s85 = sphi 0, %s69
      %s89 = sphi 0, %s89
      %s91 = sphi 0, %s89
      %s92 = sphi 0, %s91
      %s106 = sphi 0, %s92
      %s110 = sphi 0, %s110
      %s112 = sphi 0, %s110
      %s113 = sphi 0, %s112
      %s127 = sphi 0, %s113
      %s135 = sphi 0, %s137
      %s138 = sphi 0, %s135
      %s139 = sphi 0, %s138
      %s155 = sphi 0, %s139
    $region4: #{basic_block.5} parent=1 // loop_header_branch
      %16 = sbr.rel (%p14) target = $region8
    $region5: #{basic_block.5} parent=1 // loop_body
      %s18 = ssub.s32 %s13, 1
      %s19 = ssub.s32 %s13, 2
      %s26 = sadd.s32 1, %s21
      %p27 = scmp.ge.s32.totalorder %s26, 2
      %s28 = scalar_select %p27, 0, %s26
      %s29 = sadd.s32 1, %s20
      %s30 = scalar_select %p27, %s29, %s20
      %p31 = scmp.ge.s32.totalorder %s30, 2
      %s32 = scalar_select %p31, 0, %s30
      %s33 = ssub.s32 %s20, %s32
      %s34 = ssub.s32 %s21, %s28
      %s35 = sor.u32 %s33, %s34
      %p36 = scmp.eq.s32.totalorder %s35, 0
      %s38 = sadd.s32 %s37, 1
      %s39 = scalar_select %p36, %s37, %s38
      %p42 = pneg %p36
      %p43 = scmp.eq.s32.totalorder %s13, 3
      %p44 = por %p42, %p43
      %p45 = scmp.ne.s32.totalorder %s37, %s40
      %p46 = scmp.eq.s32.totalorder %s13, 0
      %p47 = por %p45, %p46
      %p48 = scmp.ne.s32.totalorder %s37, %s40
      %p49 = scmp.eq.s32.totalorder %s18, 3
      %p50 = por %p48, %p49
      %p51 = scmp.ne.s32.totalorder %s40, %s41
      %p52 = scmp.eq.s32.totalorder %s18, 0
      %p53 = por %p51, %p52
      %p54 = scmp.ne.s32.totalorder %s40, %s41
      %p55 = scmp.eq.s32.totalorder %s19, 3
      %p56 = por %p54, %p55
      %p58 = scmp.ne.s32.totalorder %s41, %s57
      %p59 = scmp.eq.s32.totalorder %s19, 0
      %p60 = por %p58, %p59
      %s61 = ssub.s32 %s20, %s32
      %s62 = ssub.s32 %s21, %s28
      %s63 = sor.u32 %s61, %s62
      %p64 = scmp.eq.s32.totalorder %s63, 0
      %s66 = sadd.s32 %s65, 1
      %s67 = scalar_select %p64, %s65, %s66
      %p70 = pneg %p64
      %p71 = scmp.eq.s32.totalorder %s13, 3
      %p72 = por %p70, %p71
      %p73 = scmp.ne.s32.totalorder %s65, %s68
      %p74 = scmp.eq.s32.totalorder %s13, 0
      %p75 = por %p73, %p74
      %p76 = scmp.ne.s32.totalorder %s65, %s68
      %p77 = scmp.eq.s32.totalorder %s18, 3
      %p78 = por %p76, %p77
      %p79 = scmp.ne.s32.totalorder %s68, %s69
      %p80 = scmp.eq.s32.totalorder %s18, 0
      %p81 = por %p79, %p80
      %p82 = scmp.ne.s32.totalorder %s68, %s69
      %p83 = scmp.eq.s32.totalorder %s19, 3
      %p84 = por %p82, %p83
      %p86 = scmp.ne.s32.totalorder %s69, %s85
      %p87 = scmp.eq.s32.totalorder %s19, 0
      %p88 = por %p86, %p87
      %s90 = sadd.s32 %s89, 1
      %p93 = scmp.eq.s32.totalorder %s13, 3
      %p94 = scmp.ne.s32.totalorder %s89, %s91
      %p95 = scmp.eq.s32.totalorder %s13, 0
      %p96 = por %p94, %p95
      %p97 = scmp.ne.s32.totalorder %s89, %s91
      %p98 = scmp.eq.s32.totalorder %s18, 3
      %p99 = por %p97, %p98
      %p100 = scmp.ne.s32.totalorder %s91, %s92
      %p101 = scmp.eq.s32.totalorder %s18, 0
      %p102 = por %p100, %p101
      %p103 = scmp.ne.s32.totalorder %s91, %s92
      %p104 = scmp.eq.s32.totalorder %s19, 3
      %p105 = por %p103, %p104
      %p107 = scmp.ne.s32.totalorder %s92, %s106
      %p108 = scmp.eq.s32.totalorder %s19, 0
      %p109 = por %p107, %p108
      %s111 = sadd.s32 %s110, 1
      %p114 = scmp.eq.s32.totalorder %s13, 3
      %p115 = scmp.ne.s32.totalorder %s110, %s112
      %p116 = scmp.eq.s32.totalorder %s13, 0
      %p117 = por %p115, %p116
      %p118 = scmp.ne.s32.totalorder %s110, %s112
      %p119 = scmp.eq.s32.totalorder %s18, 3
      %p120 = por %p118, %p119
      %p121 = scmp.ne.s32.totalorder %s112, %s113
      %p122 = scmp.eq.s32.totalorder %s18, 0
      %p123 = por %p121, %p122
      %p124 = scmp.ne.s32.totalorder %s112, %s113
      %p125 = scmp.eq.s32.totalorder %s19, 3
      %p126 = por %p124, %p125
      %p128 = scmp.ne.s32.totalorder %s113, %s127
      %p129 = scmp.eq.s32.totalorder %s19, 0
      %p130 = por %p128, %p129
      %s131 = ssub.s32 %s20, %s32
      %s132 = ssub.s32 %s21, %s28
      %s133 = sor.u32 %s131, %s132
      %p134 = scmp.eq.s32.totalorder %s133, 0
      %s136 = sadd.s32 %s135, 1
      %s137 = scalar_select %p134, %s135, %s136
      %p140 = pneg %p134
      %p141 = scmp.eq.s32.totalorder %s13, 3
      %p142 = por %p140, %p141
      %p143 = scmp.ne.s32.totalorder %s135, %s138
      %p144 = scmp.eq.s32.totalorder %s13, 0
      %p145 = por %p143, %p144
      %p146 = scmp.ne.s32.totalorder %s135, %s138
      %p147 = scmp.eq.s32.totalorder %s18, 3
      %p148 = por %p146, %p147
      %p149 = scmp.ne.s32.totalorder %s138, %s139
      %p150 = scmp.eq.s32.totalorder %s18, 0
      %p151 = por %p149, %p150
      %p152 = scmp.ne.s32.totalorder %s138, %s139
      %p153 = scmp.eq.s32.totalorder %s19, 3
      %p154 = por %p152, %p153
      %p156 = scmp.ne.s32.totalorder %s139, %s155
      %p157 = scmp.eq.s32.totalorder %s19, 0
      %p158 = por %p156, %p157
      %p159 = scmp.le.s32.totalorder 1, %s13
      %p160 = scmp.lt.s32.totalorder %s13, 5
      %p161 = pnand %p159, %p160
      %p162 = pneg %p161
      // Predicated region
      $region9: #{basic_block.5} parent=5 // pred_check
        _
      $region10: #{basic_block.5} parent=5 // pred_check_branch
        %164 = sbr.rel (%p161) target = $region12
      $region11: #{basic_block.5} parent=5 // pred_region
        %s165 = ssub.s32 %s13, 1
        // Predicated region
        $region13: #{basic_block.5} parent=11 // pred_check
          %p166 = pneg %p102
        $region14: #{basic_block.5} parent=11 // pred_check_branch
          %168 = sbr.rel (%p166) target = $region16
        $region15: #{basic_block.5} parent=11 // pred_region
          _
        $region16: #{basic_block.5} parent=11 // pred_fallthru
          _
        // Predicated region
        $region17: #{basic_block.5} parent=11 // pred_check
          %p169 = pneg %p123
        $region18: #{basic_block.5} parent=11 // pred_check_branch
          %171 = sbr.rel (%p169) target = $region20
        $region19: #{basic_block.5} parent=11 // pred_region
          _
        $region20: #{basic_block.5} parent=11 // pred_fallthru
          _
      $region12: #{basic_block.5} parent=5 // pred_fallthru
        _
      %p172 = scmp.lt.s32.totalorder %s13, 4
      // Predicated region
      $region21: #{basic_block.5} parent=5 // pred_check
        %p173 = pneg %p172
      $region22: #{basic_block.5} parent=5 // pred_check_branch
        %175 = sbr.rel (%p173) target = $region24
      $region23: #{basic_block.5} parent=5 // pred_region
        // Predicated region
        $region25: #{basic_block.5} parent=23 // pred_check
          %p176 = pneg %p47
        $region26: #{basic_block.5} parent=23 // pred_check_branch
          %178 = sbr.rel (%p176) target = $region28
        $region27: #{basic_block.5} parent=23 // pred_region
          %s179 = smul.u32 4, %s21
          %p180 = scmp.lt.s32.totalorder %s20, 1
          %s181 = scalar_select %p180, %s20, 1
          %p182 = scmp.lt.s32.totalorder %s179, 7
          %s183 = scalar_select %p182, %s179, 7
          %s184 = smul.addr %s181, 8
          %s185 = sadd.s32 %s183, %s184
          %s186 = smul.addr %s185, 4
          %s187 = scalar_lea.vmem %s0, %s186
          %s188 = smul.u32 4, %s21
        $region28: #{basic_block.5} parent=23 // pred_fallthru
          _
        // Predicated region
        $region29: #{basic_block.5} parent=23 // pred_check
          %p189 = pneg %p75
        $region30: #{basic_block.5} parent=23 // pred_check_branch
          %191 = sbr.rel (%p189) target = $region32
        $region31: #{basic_block.5} parent=23 // pred_region
          %s192 = smul.u32 4, %s21
          %p193 = scmp.lt.s32.totalorder %s20, 1
          %s194 = scalar_select %p193, %s20, 1
          %p195 = scmp.lt.s32.totalorder %s192, 7
          %s196 = scalar_select %p195, %s192, 7
          %s197 = smul.addr %s194, 8
          %s198 = sadd.s32 %s196, %s197
          %s199 = smul.addr %s198, 4
          %s200 = scalar_lea.vmem %s1, %s199
          %s201 = smul.u32 4, %s21
        $region32: #{basic_block.5} parent=23 // pred_fallthru
          _
      $region24: #{basic_block.5} parent=5 // pred_fallthru
        _
      %p202 = scmp.le.s32.totalorder 1, %s13
      %p203 = scmp.lt.s32.totalorder %s13, 5
      %p204 = pnand %p202, %p203
      %p205 = pneg %p204
      // Predicated region
      $region33: #{basic_block.5} parent=5 // pred_check
        _
      $region34: #{basic_block.5} parent=5 // pred_check_branch
        %207 = sbr.rel (%p204) target = $region36
      $region35: #{basic_block.5} parent=5 // pred_region
        %s208 = ssub.s32 %s13, 1
        %s209 = smul.u32 4, %s23
        %p210 = scmp.lt.s32.totalorder %s22, 1
        %s211 = scalar_select %p210, %s22, 1
        %p212 = scmp.lt.s32.totalorder %s209, 7
        %s213 = scalar_select %p212, %s209, 7
        %s214 = smul.addr %s211, 8
        %s215 = sadd.s32 %s213, %s214
        %s216 = smul.addr %s215, 4
        %s217 = scalar_lea.vmem %s0, %s216
        %p218 = pneg %p53
        %p219 = pneg %p50
        %s220 = smul.u32 4, %s23
        %p221 = scmp.lt.s32.totalorder %s22, 1
        %s222 = scalar_select %p221, %s22, 1
        %p223 = scmp.lt.s32.totalorder %s220, 7
        %s224 = scalar_select %p223, %s220, 7
        %s225 = smul.addr %s222, 8
        %s226 = sadd.s32 %s224, %s225
        %s227 = smul.addr %s226, 4
        %s228 = scalar_lea.vmem %s1, %s227
        %p229 = pneg %p81
        %p230 = pneg %p78
        %p231 = pneg %p102
        %p232 = pneg %p99
        %p233 = pneg %p123
        %p234 = pneg %p120
        %p235 = pneg %p151
        %p236 = pneg %p148
        %s237 = sand.u32 %s138, 1
        %s238 = scalar_lea.sflag [#allocation3], %s237
        %s239 = sand.u32 %s138, 1
        %s240 = smul.addr %s239, 16
        %s241 = scalar_lea.vmem [#allocation2], %s240
        %s242 = smul.u32 4, %s23
        %p243 = scmp.lt.s32.totalorder %s22, 1
        %s244 = scalar_select %p243, %s22, 1
        %p245 = scmp.lt.s32.totalorder %s242, 7
        %s246 = scalar_select %p245, %s242, 7
        %s247 = smul.addr %s244, 8
        %s248 = sadd.s32 %s246, %s247
        %s249 = smul.addr %s248, 4
        %s250 = scalar_lea.vmem %s0, %s249
        %s251 = smul.u32 4, %s23
        %s252 = smul.u32 4, %s23
        %p253 = scmp.lt.s32.totalorder %s22, 1
        %s254 = scalar_select %p253, %s22, 1
        %p255 = scmp.lt.s32.totalorder %s252, 7
        %s256 = scalar_select %p255, %s252, 7
        %s257 = smul.addr %s254, 8
        %s258 = sadd.s32 %s256, %s257
        %s259 = smul.addr %s258, 4
        %s260 = scalar_lea.vmem %s1, %s259
        %s261 = smul.u32 4, %s23
        %s262 = smul.u32 4, %s23
        %v263 = vld [vmem:[%s250] sm:$0xff]
        %v264 = vld [vmem:[%s250 + $0x8] sm:$0xff]
        %v265 = vld [vmem:[%s260] sm:$0xff]
        %v266 = vld [vmem:[%s260 + $0x8] sm:$0xff]
        %v267 = vld [vmem:[%s2] sm:$0xf]
        %269 = vset.pattern.permute.xlu0 0
        %270 = vperm.xlu0 %269, %v267
        %v271 = vpop.permute.xlu0 %270
        %v273 = vunpack.c.l.s4 839922192
        %v274 = vunpack.c.0.s8 %v273
        %v275 = vlaneseq
        %v276 = vshrl.u32 %v275, 7
        %v277 = vsub.s32 %v274, %v276
        %v278 = vrot.slane %v271, %v277
        %v280 = vmul.f32 %v263, %v278
        %v281 = vmul.f32 %v264, %v278
        %v282 = vld [vmem:[%s3] sm:$0xf]
        %284 = vset.pattern.permute.xlu0 0
        %285 = vperm.xlu0 %284, %v282
        %v286 = vpop.permute.xlu0 %285
        %v288 = vunpack.c.l.s4 839922192
        %v289 = vunpack.c.0.s8 %v288
        %v290 = vlaneseq
        %v291 = vshrl.u32 %v290, 7
        %v292 = vsub.s32 %v289, %v291
        %v293 = vrot.slane %v286, %v292
        %v295 = vadd.f32 %v280, %v293
        %v296 = vadd.f32 %v281, %v293
        %v297 = vmax.f32 %v295, 0.0
        %v298 = vmax.f32 %v296, 0.0
        %v299 = vadd.f32 %v297, %v265
        %v300 = vadd.f32 %v298, %v266
        %301 = vst [vmem:[%s241] sm:$0xff] %v299
        %302 = vst [vmem:[%s241 + $0x8] sm:$0xff] %v300
        %s303 = sand.u32 %s138, 1
        %s304 = scalar_lea.sflag [#allocation3], %s303
        %s305 = sand.u32 %s138, 1
        %s306 = smul.addr %s305, 16
        %s307 = scalar_lea.vmem [#allocation2], %s306
        // Predicated region
        $region37: #{basic_block.5} parent=35 // pred_check
          %p308 = pneg %p148
        $region38: #{basic_block.5} parent=35 // pred_check_branch
          %310 = sbr.rel (%p308) target = $region40
        $region39: #{basic_block.5} parent=35 // pred_region
          %s311 = smul.u32 4, %s23
          %s313 = ssub.s32 256, 256
          %314 = vsyncadd %s304, %s313
          %s315 = smul.addr %s22, 8
          %s316 = sadd.s32 %s311, %s315
          %s317 = smul.addr %s316, 64
          %s318 = scalar_lea.hbm %s4, %s317
          %s320 = sshll.u32 %s307, 4
          %s321 = int_to_ptr.vmem [resolvable:$true] %s320
          %323 = dma.vmem_to_hbm [thread:$0]  %s321, 256, %s318, %s304
        $region40: #{basic_block.5} parent=35 // pred_fallthru
          _
      $region36: #{basic_block.5} parent=5 // pred_fallthru
        _
      %p324 = scmp.le.s32.totalorder 2, %s13
      // Predicated region
      $region41: #{basic_block.5} parent=5 // pred_check
        %p325 = pneg %p324
      $region42: #{basic_block.5} parent=5 // pred_check_branch
        %327 = sbr.rel (%p325) target = $region44
      $region43: #{basic_block.5} parent=5 // pred_region
        %s328 = ssub.s32 %s13, 2
        // Predicated region
        $region45: #{basic_block.5} parent=43 // pred_check
          %p329 = pneg %p154
        $region46: #{basic_block.5} parent=43 // pred_check_branch
          %331 = sbr.rel (%p329) target = $region48
        $region47: #{basic_block.5} parent=43 // pred_region
          %s332 = sand.u32 %s139, 1
          %s333 = scalar_lea.sflag [#allocation3], %s332
          %s334 = sand.u32 %s139, 1
          %s335 = smul.addr %s334, 16
          %s336 = scalar_lea.vmem [#allocation2], %s335
          %337 = dma.done %s333, 256
        $region48: #{basic_block.5} parent=43 // pred_fallthru
          _
      $region44: #{basic_block.5} parent=5 // pred_fallthru
        _
    $region6: #{basic_block.5} parent=1 // loop_footer
      %s17 = sadd.s32 1, %s13
    $region7: #{basic_block.5} parent=1 // loop_footer_branch
      %12 = sbr.rel target = $region3
    $region8: #{basic_block.5} parent=1 // loop_exit
      _
    %338 = vsyncpa [#allocation3], 1
    %s339 = scalar_lea.sflag [#allocation3], 1
    %340 = vsyncpa %s339, 1

// kernel: basic_block.4
$region0: #{basic_block.4}
  #allocation0 [shape = 'u32[]', space=smem, size = 0x4, offset = 0x4, fixed_abs, tag = 'smem constant byte address 0x4 - core index']
  #allocation1 [shape = 'u32[144,128]{1,0:T(1,128)}', space=vmem, size = 0x12000, scoped, tag = 'internal scratch']
  %s0 = inlined_call_operand.vmem [shape: f32[2,4,1024], index: 0, kind: input, shape index: {}]
  %s1 = inlined_call_operand.vmem [shape: f32[4,1], index: 1, kind: input, shape index: {}]
  %s2 = inlined_call_operand.vmem [shape: f32[4,1], index: 2, kind: input, shape index: {}]
  %s3 = inlined_call_operand.vmem [shape: bf16[4,12], index: 3, kind: input, shape index: {}]
  %s4 = inlined_call_operand.vmem [shape: f32[2,4,1024], index: 4, kind: output, shape index: {0}]
  %s5 = inlined_call_operand.vmem [shape: f32[4,1], index: 5, kind: output, shape index: {1}]
  %s6 = inlined_call_operand.vmem [shape: f32[4,1], index: 6, kind: output, shape index: {2}]
  %7 = xla_tuple %s4, %s5, %s6
  %s8 = sld [smem:[#allocation0]]
  $region69: #{basic_block.4} parent=0
    _
  %s10 = ssub.s32 1, %s8
  %s11 = scalar_select 0, %s10, %s8
  loop: start=0, step=1, limit=4
  $region2: #{basic_block.4} parent=0 // loop_pre_header
    _
  $region3: #{basic_block.4} parent=0 // loop_header
    %s13 = sphi 0, %s17
    %p14 = scmp.ge.s32.totalorder %s13, 4
    %s23 = sphi 0, %s25
    %s26 = sphi 0, %s23
    %s27 = sphi 0, %s26
    %s43 = sphi 0, %s27
    %s47 = sphi 0, %s47
    %s49 = sphi 0, %s47
    %s50 = sphi 0, %s49
    %s64 = sphi 0, %s50
    %s68 = sphi 0, %s68
    %s70 = sphi 0, %s68
    %s71 = sphi 0, %s70
    %s85 = sphi 0, %s71
    %s89 = sphi 0, %s89
    %s91 = sphi 0, %s89
    %s92 = sphi 0, %s91
    %s106 = sphi 0, %s92
    %s112 = sphi 0, %s114
    %s115 = sphi 0, %s112
    %s116 = sphi 0, %s115
    %s132 = sphi 0, %s116
    %s136 = sphi 0, %s136
    %s138 = sphi 0, %s136
    %s139 = sphi 0, %s138
    %s153 = sphi 0, %s139
    %s157 = sphi 0, %s157
    %s159 = sphi 0, %s157
    %s160 = sphi 0, %s159
    %s174 = sphi 0, %s160
  $region4: #{basic_block.4} parent=0 // loop_header_branch
    %16 = sbr.rel (%p14) target = $region8
  $region5: #{basic_block.4} parent=0 // loop_body
    %s18 = ssub.s32 %s13, 1
    %s19 = ssub.s32 %s13, 2
    %s20 = sadd.s32 %s13, 1
    %s21 = ssub.s32 %s13, %s20
    %p22 = scmp.eq.s32.totalorder %s21, 0
    %s24 = sadd.s32 %s23, 1
    %s25 = scalar_select %p22, %s23, %s24
    %p28 = pneg %p22
    %p29 = scmp.eq.s32.totalorder %s13, 1
    %p30 = por %p28, %p29
    %p31 = scmp.ne.s32.totalorder %s23, %s26
    %p32 = scmp.eq.s32.totalorder %s13, 0
    %p33 = por %p31, %p32
    %p34 = scmp.ne.s32.totalorder %s23, %s26
    %p35 = scmp.eq.s32.totalorder %s18, 1
    %p36 = por %p34, %p35
    %p37 = scmp.ne.s32.totalorder %s26, %s27
    %p38 = scmp.eq.s32.totalorder %s18, 0
    %p39 = por %p37, %p38
    %p40 = scmp.ne.s32.totalorder %s26, %s27
    %p41 = scmp.eq.s32.totalorder %s19, 1
    %p42 = por %p40, %p41
    %p44 = scmp.ne.s32.totalorder %s27, %s43
    %p45 = scmp.eq.s32.totalorder %s19, 0
    %p46 = por %p44, %p45
    %s48 = sadd.s32 %s47, 1
    %p51 = scmp.eq.s32.totalorder %s13, 1
    %p52 = scmp.ne.s32.totalorder %s47, %s49
    %p53 = scmp.eq.s32.totalorder %s13, 0
    %p54 = por %p52, %p53
    %p55 = scmp.ne.s32.totalorder %s47, %s49
    %p56 = scmp.eq.s32.totalorder %s18, 1
    %p57 = por %p55, %p56
    %p58 = scmp.ne.s32.totalorder %s49, %s50
    %p59 = scmp.eq.s32.totalorder %s18, 0
    %p60 = por %p58, %p59
    %p61 = scmp.ne.s32.totalorder %s49, %s50
    %p62 = scmp.eq.s32.totalorder %s19, 1
    %p63 = por %p61, %p62
    %p65 = scmp.ne.s32.totalorder %s50, %s64
    %p66 = scmp.eq.s32.totalorder %s19, 0
    %p67 = por %p65, %p66
    %s69 = sadd.s32 %s68, 1
    %p72 = scmp.eq.s32.totalorder %s13, 1
    %p73 = scmp.ne.s32.totalorder %s68, %s70
    %p74 = scmp.eq.s32.totalorder %s13, 0
    %p75 = por %p73, %p74
    %p76 = scmp.ne.s32.totalorder %s68, %s70
    %p77 = scmp.eq.s32.totalorder %s18, 1
    %p78 = por %p76, %p77
    %p79 = scmp.ne.s32.totalorder %s70, %s71
    %p80 = scmp.eq.s32.totalorder %s18, 0
    %p81 = por %p79, %p80
    %p82 = scmp.ne.s32.totalorder %s70, %s71
    %p83 = scmp.eq.s32.totalorder %s19, 1
    %p84 = por %p82, %p83
    %p86 = scmp.ne.s32.totalorder %s71, %s85
    %p87 = scmp.eq.s32.totalorder %s19, 0
    %p88 = por %p86, %p87
    %s90 = sadd.s32 %s89, 1
    %p93 = scmp.eq.s32.totalorder %s13, 1
    %p94 = scmp.ne.s32.totalorder %s89, %s91
    %p95 = scmp.eq.s32.totalorder %s13, 0
    %p96 = por %p94, %p95
    %p97 = scmp.ne.s32.totalorder %s89, %s91
    %p98 = scmp.eq.s32.totalorder %s18, 1
    %p99 = por %p97, %p98
    %p100 = scmp.ne.s32.totalorder %s91, %s92
    %p101 = scmp.eq.s32.totalorder %s18, 0
    %p102 = por %p100, %p101
    %p103 = scmp.ne.s32.totalorder %s91, %s92
    %p104 = scmp.eq.s32.totalorder %s19, 1
    %p105 = por %p103, %p104
    %p107 = scmp.ne.s32.totalorder %s92, %s106
    %p108 = scmp.eq.s32.totalorder %s19, 0
    %p109 = por %p107, %p108
    %s110 = ssub.s32 %s13, %s20
    %p111 = scmp.eq.s32.totalorder %s110, 0
    %s113 = sadd.s32 %s112, 1
    %s114 = scalar_select %p111, %s112, %s113
    %p117 = pneg %p111
    %p118 = scmp.eq.s32.totalorder %s13, 1
    %p119 = por %p117, %p118
    %p120 = scmp.ne.s32.totalorder %s112, %s115
    %p121 = scmp.eq.s32.totalorder %s13, 0
    %p122 = por %p120, %p121
    %p123 = scmp.ne.s32.totalorder %s112, %s115
    %p124 = scmp.eq.s32.totalorder %s18, 1
    %p125 = por %p123, %p124
    %p126 = scmp.ne.s32.totalorder %s115, %s116
    %p127 = scmp.eq.s32.totalorder %s18, 0
    %p128 = por %p126, %p127
    %p129 = scmp.ne.s32.totalorder %s115, %s116
    %p130 = scmp.eq.s32.totalorder %s19, 1
    %p131 = por %p129, %p130
    %p133 = scmp.ne.s32.totalorder %s116, %s132
    %p134 = scmp.eq.s32.totalorder %s19, 0
    %p135 = por %p133, %p134
    %s137 = sadd.s32 %s136, 1
    %p140 = scmp.eq.s32.totalorder %s13, 1
    %p141 = scmp.ne.s32.totalorder %s136, %s138
    %p142 = scmp.eq.s32.totalorder %s13, 0
    %p143 = por %p141, %p142
    %p144 = scmp.ne.s32.totalorder %s136, %s138
    %p145 = scmp.eq.s32.totalorder %s18, 1
    %p146 = por %p144, %p145
    %p147 = scmp.ne.s32.totalorder %s138, %s139
    %p148 = scmp.eq.s32.totalorder %s18, 0
    %p149 = por %p147, %p148
    %p150 = scmp.ne.s32.totalorder %s138, %s139
    %p151 = scmp.eq.s32.totalorder %s19, 1
    %p152 = por %p150, %p151
    %p154 = scmp.ne.s32.totalorder %s139, %s153
    %p155 = scmp.eq.s32.totalorder %s19, 0
    %p156 = por %p154, %p155
    %s158 = sadd.s32 %s157, 1
    %p161 = scmp.eq.s32.totalorder %s13, 1
    %p162 = scmp.ne.s32.totalorder %s157, %s159
    %p163 = scmp.eq.s32.totalorder %s13, 0
    %p164 = por %p162, %p163
    %p165 = scmp.ne.s32.totalorder %s157, %s159
    %p166 = scmp.eq.s32.totalorder %s18, 1
    %p167 = por %p165, %p166
    %p168 = scmp.ne.s32.totalorder %s159, %s160
    %p169 = scmp.eq.s32.totalorder %s18, 0
    %p170 = por %p168, %p169
    %p171 = scmp.ne.s32.totalorder %s159, %s160
    %p172 = scmp.eq.s32.totalorder %s19, 1
    %p173 = por %p171, %p172
    %p175 = scmp.ne.s32.totalorder %s160, %s174
    %p176 = scmp.eq.s32.totalorder %s19, 0
    %p177 = por %p175, %p176
    %p178 = scmp.le.s32.totalorder 1, %s13
    %p179 = scmp.lt.s32.totalorder %s13, 3
    %p180 = pnand %p178, %p179
    %p181 = pneg %p180
    // Predicated region
    $region9: #{basic_block.4} parent=5 // pred_check
      _
    $region10: #{basic_block.4} parent=5 // pred_check_branch
      %183 = sbr.rel (%p180) target = $region12
    $region11: #{basic_block.4} parent=5 // pred_region
      %s184 = ssub.s32 %s13, 1
      // Predicated region
      $region13: #{basic_block.4} parent=11 // pred_check
        %p185 = pneg %p60
      $region14: #{basic_block.4} parent=11 // pred_check_branch
        %187 = sbr.rel (%p185) target = $region16
      $region15: #{basic_block.4} parent=11 // pred_region
        _
      $region16: #{basic_block.4} parent=11 // pred_fallthru
        _
      // Predicated region
      $region17: #{basic_block.4} parent=11 // pred_check
        %p188 = pneg %p81
      $region18: #{basic_block.4} parent=11 // pred_check_branch
        %190 = sbr.rel (%p188) target = $region20
      $region19: #{basic_block.4} parent=11 // pred_region
        _
      $region20: #{basic_block.4} parent=11 // pred_fallthru
        _
      // Predicated region
      $region21: #{basic_block.4} parent=11 // pred_check
        %p191 = pneg %p102
      $region22: #{basic_block.4} parent=11 // pred_check_branch
        %193 = sbr.rel (%p191) target = $region24
      $region23: #{basic_block.4} parent=11 // pred_region
        _
      $region24: #{basic_block.4} parent=11 // pred_fallthru
        _
    $region12: #{basic_block.4} parent=5 // pred_fallthru
      _
    %p194 = scmp.lt.s32.totalorder %s13, 2
    // Predicated region
    $region25: #{basic_block.4} parent=5 // pred_check
      %p195 = pneg %p194
    $region26: #{basic_block.4} parent=5 // pred_check_branch
      %197 = sbr.rel (%p195) target = $region28
    $region27: #{basic_block.4} parent=5 // pred_region
      // Predicated region
      $region29: #{basic_block.4} parent=27 // pred_check
        %p198 = pneg %p33
      $region30: #{basic_block.4} parent=27 // pred_check_branch
        %200 = sbr.rel (%p198) target = $region32
      $region31: #{basic_block.4} parent=27 // pred_region
        %p201 = scmp.lt.s32.totalorder %s13, 1
        %s202 = scalar_select %p201, %s13, 1
        %s203 = smul.addr %s202, 8
        %s204 = smul.addr %s203, 4
        %s205 = scalar_lea.vmem %s0, %s204
      $region32: #{basic_block.4} parent=27 // pred_fallthru
        _
    $region28: #{basic_block.4} parent=5 // pred_fallthru
      _
    %p206 = scmp.le.s32.totalorder 1, %s13
    %p207 = scmp.lt.s32.totalorder %s13, 3
    %p208 = pnand %p206, %p207
    %p209 = pneg %p208
    // Predicated region
    $region33: #{basic_block.4} parent=5 // pred_check
      _
    $region34: #{basic_block.4} parent=5 // pred_check_branch
      %211 = sbr.rel (%p208) target = $region36
    $region35: #{basic_block.4} parent=5 // pred_region
      %s212 = ssub.s32 %s13, 1
      %p213 = scmp.lt.s32.totalorder %s18, 1
      %s214 = scalar_select %p213, %s18, 1
      %s215 = smul.addr %s214, 8
      %s216 = smul.addr %s215, 4
      %s217 = scalar_lea.vmem %s0, %s216
      %p218 = pneg %p39
      %p219 = pneg %p36
      %p220 = pneg %p60
      %p221 = pneg %p57
      %p222 = pneg %p81
      %p223 = pneg %p78
      %p224 = pneg %p102
      %p225 = pneg %p99
      %p226 = pneg %p128
      %p227 = pneg %p125
      %p228 = scmp.lt.s32.totalorder %s18, 1
      %s229 = scalar_select %p228, %s18, 1
      %s230 = smul.addr %s229, 8
      %s231 = smul.addr %s230, 4
      %s232 = scalar_lea.vmem %s4, %s231
      %p233 = pneg %p149
      %p234 = pneg %p146
      %p235 = pneg %p170
      %p236 = pneg %p167
      %p237 = scmp.lt.s32.totalorder %s18, 1
      %s238 = scalar_select %p237, %s18, 1
      %s239 = smul.addr %s238, 8
      %s240 = smul.addr %s239, 4
      %s241 = scalar_lea.vmem %s0, %s240
      %p242 = scmp.lt.s32.totalorder %s18, 1
      %s243 = scalar_select %p242, %s18, 1
      %s244 = smul.addr %s243, 8
      %s245 = smul.addr %s244, 4
      %s246 = scalar_lea.vmem %s4, %s245
      %v248 = vld [vmem:[%s241] sm:$0xff]
      %v249 = vld [vmem:[%s241 + $0x8] sm:$0xff]
      %v250 = vld [vmem:[%s241 + $0x10] sm:$0xff]
      %v251 = vld [vmem:[%s241 + $0x18] sm:$0xff]
      %v252 = vld [vmem:[%s1] sm:$0xf]
      %254 = vset.pattern.permute.xlu0 0
      %255 = vperm.xlu0 %254, %v252
      %v256 = vpop.permute.xlu0 %255
      %v258 = vunpack.c.l.s4 839922192
      %v259 = vunpack.c.0.s8 %v258
      %v260 = vlaneseq
      %v261 = vshrl.u32 %v260, 7
      %v262 = vsub.s32 %v259, %v261
      %v263 = vrot.slane %v256, %v262
      %v265 = vmul.f32 %v248, %v263
      %v266 = vmul.f32 %v249, %v263
      %v267 = vmul.f32 %v250, %v263
      %v268 = vmul.f32 %v251, %v263
      %v269 = vld [vmem:[%s2] sm:$0xf]
      %271 = vset.pattern.permute.xlu0 0
      %272 = vperm.xlu0 %271, %v269
      %v273 = vpop.permute.xlu0 %272
      %v275 = vunpack.c.l.s4 839922192
      %v276 = vunpack.c.0.s8 %v275
      %v277 = vlaneseq
      %v278 = vshrl.u32 %v277, 7
      %v279 = vsub.s32 %v276, %v278
      %v280 = vrot.slane %v273, %v279
      %v282 = vadd.f32 %v265, %v280
      %v283 = vadd.f32 %v266, %v280
      %v284 = vadd.f32 %v267, %v280
      %v285 = vadd.f32 %v268, %v280
      %v286 = vmax.f32 %v282, 0.0
      %v287 = vmax.f32 %v283, 0.0
      %v288 = vmax.f32 %v284, 0.0
      %v289 = vmax.f32 %v285, 0.0
      %v290 = vlaneseq
      %v291 = vand.u32 %v290, 127
      %v292 = vadd.s32 %v291, 128
      %v293 = vadd.s32 %v291, 256
      %v294 = vadd.s32 %v291, 384
      %v295 = vadd.s32 %v291, 512
      %v296 = vadd.s32 %v291, 640
      %v297 = vadd.s32 %v291, 768
      %v298 = vadd.s32 %v291, 896
      %v303 = vcombine.high %v286, %v286
      %v304 = vcombine.high %v287, %v287
      %v305 = vcombine.high %v288, %v288
      %v306 = vcombine.high %v289, %v289
      %311 = vrot.lane.b32.xlu0 %v286, 1
      %v312 = vpop.permute.xlu0 %311
      %313 = vrot.lane.b32.xlu0 %v303, 1
      %v314 = vpop.permute.xlu0 %313
      %315 = vrot.lane.b32.xlu0 %v287, 1
      %v316 = vpop.permute.xlu0 %315
      %317 = vrot.lane.b32.xlu0 %v304, 1
      %v318 = vpop.permute.xlu0 %317
      %319 = vrot.lane.b32.xlu0 %v288, 1
      %v320 = vpop.permute.xlu0 %319
      %321 = vrot.lane.b32.xlu0 %v305, 1
      %v322 = vpop.permute.xlu0 %321
      %323 = vrot.lane.b32.xlu0 %v289, 1
      %v324 = vpop.permute.xlu0 %323
      %325 = vrot.lane.b32.xlu0 %v306, 1
      %v326 = vpop.permute.xlu0 %325
      %vm327 = vcmp.lt.s32.totalorder %v291, 1
      %v328 = vsel %vm327, %v324, %v326
      %v329 = vsel %vm327, %v322, %v324
      %v330 = vsel %vm327, %v320, %v322
      %v331 = vsel %vm327, %v318, %v320
      %v332 = vsel %vm327, %v316, %v318
      %v333 = vsel %vm327, %v314, %v316
      %v334 = vsel %vm327, %v312, %v314
      %v335 = vsel %vm327, %v326, %v312
      %v336 = vadd.s32 %v291, 4294967295
      %v337 = vadd.s32 %v292, 4294967295
      %v338 = vadd.s32 %v293, 4294967295
      %v339 = vadd.s32 %v294, 4294967295
      %v340 = vadd.s32 %v295, 4294967295
      %v341 = vadd.s32 %v296, 4294967295
      %v342 = vadd.s32 %v297, 4294967295
      %v343 = vadd.s32 %v298, 4294967295
      %vm344 = vcmp.ge.s32.totalorder %v336, 0
      %vm345 = vcmp.ge.s32.totalorder %v337, 0
      %vm346 = vcmp.ge.s32.totalorder %v338, 0
      %vm347 = vcmp.ge.s32.totalorder %v339, 0
      %vm348 = vcmp.ge.s32.totalorder %v340, 0
      %vm349 = vcmp.ge.s32.totalorder %v341, 0
      %vm350 = vcmp.ge.s32.totalorder %v342, 0
      %vm351 = vcmp.ge.s32.totalorder %v343, 0
      %vm352 = vcmp.lt.s32.totalorder %v336, 1024
      %vm353 = vcmp.lt.s32.totalorder %v337, 1024
      %vm354 = vcmp.lt.s32.totalorder %v338, 1024
      %vm355 = vcmp.lt.s32.totalorder %v339, 1024
      %vm356 = vcmp.lt.s32.totalorder %v340, 1024
      %vm357 = vcmp.lt.s32.totalorder %v341, 1024
      %vm358 = vcmp.lt.s32.totalorder %v342, 1024
      %vm359 = vcmp.lt.s32.totalorder %v343, 1024
      %vm360 = vmand %vm344, %vm352
      %vm361 = vmand %vm345, %vm353
      %vm362 = vmand %vm346, %vm354
      %vm363 = vmand %vm347, %vm355
      %vm364 = vmand %vm348, %vm356
      %vm365 = vmand %vm349, %vm357
      %vm366 = vmand %vm350, %vm358
      %vm367 = vmand %vm351, %vm359
      %v368 = vsel %vm360, %v335, 0.0
      %v369 = vsel %vm361, %v334, 0.0
      %v370 = vsel %vm362, %v333, 0.0
      %v371 = vsel %vm363, %v332, 0.0
      %v372 = vsel %vm364, %v331, 0.0
      %v373 = vsel %vm365, %v330, 0.0
      %v374 = vsel %vm366, %v329, 0.0
      %v375 = vsel %vm367, %v328, 0.0
      %376 = vrot.lane.b32.xlu0 %v286, 127
      %v377 = vpop.permute.xlu0 %376
      %378 = vrot.lane.b32.xlu0 %v303, 127
      %v379 = vpop.permute.xlu0 %378
      %380 = vrot.lane.b32.xlu0 %v287, 127
      %v381 = vpop.permute.xlu0 %380
      %382 = vrot.lane.b32.xlu0 %v304, 127
      %v383 = vpop.permute.xlu0 %382
      %384 = vrot.lane.b32.xlu0 %v288, 127
      %v385 = vpop.permute.xlu0 %384
      %386 = vrot.lane.b32.xlu0 %v305, 127
      %v387 = vpop.permute.xlu0 %386
      %388 = vrot.lane.b32.xlu0 %v289, 127
      %v389 = vpop.permute.xlu0 %388
      %390 = vrot.lane.b32.xlu0 %v306, 127
      %v391 = vpop.permute.xlu0 %390
      %vm392 = vcmp.lt.s32.totalorder %v291, 127
      %v393 = vsel %vm392, %v389, %v391
      %v394 = vsel %vm392, %v387, %v389
      %v395 = vsel %vm392, %v385, %v387
      %v396 = vsel %vm392, %v383, %v385
      %v397 = vsel %vm392, %v381, %v383
      %v398 = vsel %vm392, %v379, %v381
      %v399 = vsel %vm392, %v377, %v379
      %v400 = vsel %vm392, %v391, %v377
      %v401 = vadd.s32 %v291, 1
      %v402 = vadd.s32 %v292, 1
      %v403 = vadd.s32 %v293, 1
      %v404 = vadd.s32 %v294, 1
      %v405 = vadd.s32 %v295, 1
      %v406 = vadd.s32 %v296, 1
      %v407 = vadd.s32 %v297, 1
      %v408 = vadd.s32 %v298, 1
      %vm409 = vcmp.ge.s32.totalorder %v401, 0
      %vm410 = vcmp.ge.s32.totalorder %v402, 0
      %vm411 = vcmp.ge.s32.totalorder %v403, 0
      %vm412 = vcmp.ge.s32.totalorder %v404, 0
      %vm413 = vcmp.ge.s32.totalorder %v405, 0
      %vm414 = vcmp.ge.s32.totalorder %v406, 0
      %vm415 = vcmp.ge.s32.totalorder %v407, 0
      %vm416 = vcmp.ge.s32.totalorder %v408, 0
      %vm417 = vcmp.lt.s32.totalorder %v401, 1024
      %vm418 = vcmp.lt.s32.totalorder %v402, 1024
      %vm419 = vcmp.lt.s32.totalorder %v403, 1024
      %vm420 = vcmp.lt.s32.totalorder %v404, 1024
      %vm421 = vcmp.lt.s32.totalorder %v405, 1024
      %vm422 = vcmp.lt.s32.totalorder %v406, 1024
      %vm423 = vcmp.lt.s32.totalorder %v407, 1024
      %vm424 = vcmp.lt.s32.totalorder %v408, 1024
      %vm425 = vmand %vm409, %vm417
      %vm426 = vmand %vm410, %vm418
      %vm427 = vmand %vm411, %vm419
      %vm428 = vmand %vm412, %vm420
      %vm429 = vmand %vm413, %vm421
      %vm430 = vmand %vm414, %vm422
      %vm431 = vmand %vm415, %vm423
      %vm432 = vmand %vm416, %vm424
      %v433 = vsel %vm425, %v399, 0.0
      %v434 = vsel %vm426, %v398, 0.0
      %v435 = vsel %vm427, %v397, 0.0
      %v436 = vsel %vm428, %v396, 0.0
      %v437 = vsel %vm429, %v395, 0.0
      %v438 = vsel %vm430, %v394, 0.0
      %v439 = vsel %vm431, %v393, 0.0
      %v440 = vsel %vm432, %v400, 0.0
      %v441 = vcombine.low %v286, %v286
      %v442 = vcombine.low %v287, %v287
      %v443 = vcombine.low %v288, %v288
      %v444 = vcombine.low %v289, %v289
      %vm449 = vcmask 1043456
      %v450 = vsel %vm449, %v368, %v441
      %v451 = vsel %vm449, %v369, %v286
      %v452 = vsel %vm449, %v370, %v442
      %v453 = vsel %vm449, %v371, %v287
      %v454 = vsel %vm449, %v372, %v443
      %v455 = vsel %vm449, %v373, %v288
      %v456 = vsel %vm449, %v374, %v444
      %v457 = vsel %vm449, %v375, %v289
      %v458 = vpack.c.bf16 %v433, %v450
      %v459 = vpack.c.bf16 %v434, %v451
      %v460 = vpack.c.bf16 %v435, %v452
      %v461 = vpack.c.bf16 %v436, %v453
      %v462 = vpack.c.bf16 %v437, %v454
      %v463 = vpack.c.bf16 %v438, %v455
      %v464 = vpack.c.bf16 %v439, %v456
      %v465 = vpack.c.bf16 %v440, %v457
      %v466 = vld [vmem:[%s3] sm:$0x3]
      %vm467 = vcmask 97280
      %v469 = vsel %vm467, %v466, 0
      %vm471 = vcmask 1045504
      %v473 = vsel %vm471, %v458, 0
      %v476 = vsel %vm471, %v459, 0
      %v479 = vsel %vm471, %v460, 0
      %v482 = vsel %vm471, %v461, 0
      %v485 = vsel %vm471, %v462, 0
      %v488 = vsel %vm471, %v463, 0
      %v491 = vsel %vm471, %v464, 0
      %v494 = vsel %vm471, %v465, 0
      %496 = vmatprep.subr.bf16.mxu0 0
      %497 = vmatpush1.bf16.msra.mxu0 0
      %498 = vmatprep.subr.bf16.mxu0 0
      %499 = vmatpush1.bf16.msra.mxu0 0
      %500 = vmatprep.subr.bf16.mxu0 0
      %501 = vmatpush1.bf16.msra.mxu0 0
      %502 = vmatprep.subr.bf16.mxu0 0
      %503 = vmatpush1.bf16.msra.mxu0 0
      %504 = vmatprep.subr.bf16.mxu0 0
      %505 = vmatpush1.bf16.msra.mxu0 0
      %506 = vmatprep.subr.bf16.mxu0 0
      %507 = vmatpush1.bf16.msra.mxu0 0
      %508 = vmatprep.subr.bf16.mxu0 0
      %509 = vmatpush1.bf16.msra.mxu0 0
      %510 = vmatprep.subr.bf16.mxu0 %v476
      %511 = vmatpush1.bf16.msra.mxu0 %v473
      %512 = vmatprep.subr.bf16.mxu0 0
      %513 = vmatpush2.bf16.msra.mxu0 0
      %514 = vmatprep.subr.bf16.mxu0 0
      %515 = vmatpush2.bf16.msra.mxu0 0
      %516 = vmatprep.subr.bf16.mxu0 0
      %517 = vmatpush2.bf16.msra.mxu0 0
      %518 = vmatprep.subr.bf16.mxu0 0
      %519 = vmatpush2.bf16.msra.mxu0 0
      %520 = vmatprep.subr.bf16.mxu0 0
      %521 = vmatpush2.bf16.msra.mxu0 0
      %522 = vmatprep.subr.bf16.mxu0 0
      %523 = vmatpush2.bf16.msra.mxu0 0
      %524 = vmatprep.subr.bf16.mxu0 0
      %525 = vmatpush2.bf16.msra.mxu0 0
      %526 = vmatprep.subr.bf16.mxu0 0
      %527 = vmatpush2.bf16.msra.mxu0 0
      %528 = vmatprep.mubr.bf16.mxu0 0
      %529 = vmatmul.mubr.bf16.gmra.mxu0 %v469
      %v530 = vpop.f32.mrf.mxu0
      %v531 = vadd.f32 0.0, %v530
      %v532 = vpop.f32.mrf.mxu0
      %v533 = vadd.f32 0.0, %v532
      %v534 = vpop.f32.mrf.mxu0
      %v535 = vpop.f32.mrf.mxu0
      %536 = vdwg.mxu0
      %537 = vmatprep.subr.bf16.mxu0 0
      %538 = vmatpush1.bf16.msra.mxu0 0
      %539 = vmatprep.subr.bf16.mxu0 0
      %540 = vmatpush1.bf16.msra.mxu0 0
      %541 = vmatprep.subr.bf16.mxu0 0
      %542 = vmatpush1.bf16.msra.mxu0 0
      %543 = vmatprep.subr.bf16.mxu0 0
      %544 = vmatpush1.bf16.msra.mxu0 0
      %545 = vmatprep.subr.bf16.mxu0 0
      %546 = vmatpush1.bf16.msra.mxu0 0
      %547 = vmatprep.subr.bf16.mxu0 0
      %548 = vmatpush1.bf16.msra.mxu0 0
      %549 = vmatprep.subr.bf16.mxu0 0
      %550 = vmatpush1.bf16.msra.mxu0 0
      %551 = vmatprep.subr.bf16.mxu0 %v482
      %552 = vmatpush1.bf16.msra.mxu0 %v479
      %553 = vmatprep.subr.bf16.mxu0 0
      %554 = vmatpush2.bf16.msra.mxu0 0
      %555 = vmatprep.subr.bf16.mxu0 0
      %556 = vmatpush2.bf16.msra.mxu0 0
      %557 = vmatprep.subr.bf16.mxu0 0
      %558 = vmatpush2.bf16.msra.mxu0 0
      %559 = vmatprep.subr.bf16.mxu0 0
      %560 = vmatpush2.bf16.msra.mxu0 0
      %561 = vmatprep.subr.bf16.mxu0 0
      %562 = vmatpush2.bf16.msra.mxu0 0
      %563 = vmatprep.subr.bf16.mxu0 0
      %564 = vmatpush2.bf16.msra.mxu0 0
      %565 = vmatprep.subr.bf16.mxu0 0
      %566 = vmatpush2.bf16.msra.mxu0 0
      %567 = vmatprep.subr.bf16.mxu0 0
      %568 = vmatpush2.bf16.msra.mxu0 0
      %569 = vmatprep.mubr.bf16.mxu0 0
      %570 = vmatmul.mubr.bf16.gmra.mxu0 %v469
      %v571 = vpop.f32.mrf.mxu0
      %v572 = vadd.f32 0.0, %v571
      %v573 = vpop.f32.mrf.mxu0
      %v574 = vadd.f32 0.0, %v573
      %v575 = vpop.f32.mrf.mxu0
      %v576 = vpop.f32.mrf.mxu0
      %577 = vdwg.mxu0
      %578 = vmatprep.subr.bf16.mxu0 0
      %579 = vmatpush1.bf16.msra.mxu0 0
      %580 = vmatprep.subr.bf16.mxu0 0
      %581 = vmatpush1.bf16.msra.mxu0 0
      %582 = vmatprep.subr.bf16.mxu0 0
      %583 = vmatpush1.bf16.msra.mxu0 0
      %584 = vmatprep.subr.bf16.mxu0 0
      %585 = vmatpush1.bf16.msra.mxu0 0
      %586 = vmatprep.subr.bf16.mxu0 0
      %587 = vmatpush1.bf16.msra.mxu0 0
      %588 = vmatprep.subr.bf16.mxu0 0
      %589 = vmatpush1.bf16.msra.mxu0 0
      %590 = vmatprep.subr.bf16.mxu0 0
      %591 = vmatpush1.bf16.msra.mxu0 0
      %592 = vmatprep.subr.bf16.mxu0 %v488
      %593 = vmatpush1.bf16.msra.mxu0 %v485
      %594 = vmatprep.subr.bf16.mxu0 0
      %595 = vmatpush2.bf16.msra.mxu0 0
      %596 = vmatprep.subr.bf16.mxu0 0
      %597 = vmatpush2.bf16.msra.mxu0 0
      %598 = vmatprep.subr.bf16.mxu0 0
      %599 = vmatpush2.bf16.msra.mxu0 0
      %600 = vmatprep.subr.bf16.mxu0 0
      %601 = vmatpush2.bf16.msra.mxu0 0
      %602 = vmatprep.subr.bf16.mxu0 0
      %603 = vmatpush2.bf16.msra.mxu0 0
      %604 = vmatprep.subr.bf16.mxu0 0
      %605 = vmatpush2.bf16.msra.mxu0 0
      %606 = vmatprep.subr.bf16.mxu0 0
      %607 = vmatpush2.bf16.msra.mxu0 0
      %608 = vmatprep.subr.bf16.mxu0 0
      %609 = vmatpush2.bf16.msra.mxu0 0
      %610 = vmatprep.mubr.bf16.mxu0 0
      %611 = vmatmul.mubr.bf16.gmra.mxu0 %v469
      %v612 = vpop.f32.mrf.mxu0
      %v613 = vadd.f32 0.0, %v612
      %v614 = vpop.f32.mrf.mxu0
      %v615 = vadd.f32 0.0, %v614
      %v616 = vpop.f32.mrf.mxu0
      %v617 = vpop.f32.mrf.mxu0
      %618 = vdwg.mxu0
      %619 = vmatprep.subr.bf16.mxu0 0
      %620 = vmatpush1.bf16.msra.mxu0 0
      %621 = vmatprep.subr.bf16.mxu0 0
      %622 = vmatpush1.bf16.msra.mxu0 0
      %623 = vmatprep.subr.bf16.mxu0 0
      %624 = vmatpush1.bf16.msra.mxu0 0
      %625 = vmatprep.subr.bf16.mxu0 0
      %626 = vmatpush1.bf16.msra.mxu0 0
      %627 = vmatprep.subr.bf16.mxu0 0
      %628 = vmatpush1.bf16.msra.mxu0 0
      %629 = vmatprep.subr.bf16.mxu0 0
      %630 = vmatpush1.bf16.msra.mxu0 0
      %631 = vmatprep.subr.bf16.mxu0 0
      %632 = vmatpush1.bf16.msra.mxu0 0
      %633 = vmatprep.subr.bf16.mxu0 %v494
      %634 = vmatpush1.bf16.msra.mxu0 %v491
      %635 = vmatprep.subr.bf16.mxu0 0
      %636 = vmatpush2.bf16.msra.mxu0 0
      %637 = vmatprep.subr.bf16.mxu0 0
      %638 = vmatpush2.bf16.msra.mxu0 0
      %639 = vmatprep.subr.bf16.mxu0 0
      %640 = vmatpush2.bf16.msra.mxu0 0
      %641 = vmatprep.subr.bf16.mxu0 0
      %642 = vmatpush2.bf16.msra.mxu0 0
      %643 = vmatprep.subr.bf16.mxu0 0
      %644 = vmatpush2.bf16.msra.mxu0 0
      %645 = vmatprep.subr.bf16.mxu0 0
      %646 = vmatpush2.bf16.msra.mxu0 0
      %647 = vmatprep.subr.bf16.mxu0 0
      %648 = vmatpush2.bf16.msra.mxu0 0
      %649 = vmatprep.subr.bf16.mxu0 0
      %650 = vmatpush2.bf16.msra.mxu0 0
      %651 = vmatprep.mubr.bf16.mxu0 0
      %652 = vmatmul.mubr.bf16.gmra.mxu0 %v469
      %v653 = vpop.f32.mrf.mxu0
      %v654 = vadd.f32 0.0, %v653
      %v655 = vpop.f32.mrf.mxu0
      %v656 = vadd.f32 0.0, %v655
      %v657 = vpop.f32.mrf.mxu0
      %v658 = vpop.f32.mrf.mxu0
      %659 = vdwg.mxu0
      %v668 = vcombine.low %v531, %v533
      %v669 = vcombine.low %v572, %v574
      %v670 = vcombine.low %v613, %v615
      %v671 = vcombine.low %v654, %v656
      %676 = vst [vmem:[%s246] sm:$0xff] %v668
      %677 = vst [vmem:[%s246 + $0x8] sm:$0xff] %v669
      %678 = vst [vmem:[%s246 + $0x10] sm:$0xff] %v670
      %679 = vst [vmem:[%s246 + $0x18] sm:$0xff] %v671
      %p680 = scmp.eq.s32.totalorder %s18, 0
      // Predicated region
      $region37: #{basic_block.4} parent=35 // pred_check
        %p681 = pneg %p680
      $region38: #{basic_block.4} parent=35 // pred_check_branch
        %683 = sbr.rel (%p681) target = $region40
      $region39: #{basic_block.4} parent=35 // pred_region
        %vm684 = vcmask 3072
        %685 = vst.msk [vmem:[%s5] sm:$0xf] %vm684, 0.0
        %686 = vst.msk [vmem:[%s6] sm:$0xf] %vm684, 0.0
      $region40: #{basic_block.4} parent=35 // pred_fallthru
        _
      %v687 = vld [vmem:[%s5] sm:$0xf]
      %v688 = vsel %vm449, %v531, 0.0
      %v689 = vsel %vm449, %v533, 0.0
      %v690 = vadd.f32 %v688, %v689
      %v691 = vsel %vm449, %v572, 0.0
      %v692 = vadd.f32 %v690, %v691
      %v693 = vsel %vm449, %v574, 0.0
      %v694 = vadd.f32 %v692, %v693
      %v695 = vsel %vm449, %v613, 0.0
      %v696 = vadd.f32 %v694, %v695
      %v697 = vsel %vm449, %v615, 0.0
      %v698 = vadd.f32 %v696, %v697
      %v699 = vsel %vm449, %v654, 0.0
      %v700 = vadd.f32 %v698, %v699
      %v701 = vsel %vm449, %v656, 0.0
      %v702 = vadd.f32 %v700, %v701
      %703 = vadd.xlane.f32.xlu0 %v702
      %v704 = vpop.xlane.xlu0 %703
      %v705 = vadd.f32 %v687, %v704
      %vm706 = vcmask 3072
      %707 = vst.msk [vmem:[%s5] sm:$0xf] %vm706, %v705
      %v708 = vld [vmem:[%s6] sm:$0xf]
      %v709 = vmul.f32 %v531, %v531
      %v710 = vmul.f32 %v533, %v533
      %v711 = vmul.f32 %v572, %v572
      %v712 = vmul.f32 %v574, %v574
      %v713 = vmul.f32 %v613, %v613
      %v714 = vmul.f32 %v615, %v615
      %v715 = vmul.f32 %v654, %v654
      %v716 = vmul.f32 %v656, %v656
      %v717 = vsel %vm449, %v709, 0.0
      %v718 = vsel %vm449, %v710, 0.0
      %v719 = vadd.f32 %v717, %v718
      %v720 = vsel %vm449, %v711, 0.0
      %v721 = vadd.f32 %v719, %v720
      %v722 = vsel %vm449, %v712, 0.0
      %v723 = vadd.f32 %v721, %v722
      %v724 = vsel %vm449, %v713, 0.0
      %v725 = vadd.f32 %v723, %v724
      %v726 = vsel %vm449, %v714, 0.0
      %v727 = vadd.f32 %v725, %v726
      %v728 = vsel %vm449, %v715, 0.0
      %v729 = vadd.f32 %v727, %v728
      %v730 = vsel %vm449, %v716, 0.0
      %v731 = vadd.f32 %v729, %v730
      %732 = vadd.xlane.f32.xlu0 %v731
      %v733 = vpop.xlane.xlu0 %732
      %v734 = vadd.f32 %v708, %v733
      %735 = vst.msk [vmem:[%s6] sm:$0xf] %vm706, %v734
      %p736 = scmp.lt.s32.totalorder %s18, 1
      %s737 = scalar_select %p736, %s18, 1
      %s738 = smul.addr %s737, 8
      %s739 = smul.addr %s738, 4
      %s740 = scalar_lea.vmem %s4, %s739
      // Predicated region
      $region41: #{basic_block.4} parent=35 // pred_check
        %p741 = pneg %p125
      $region42: #{basic_block.4} parent=35 // pred_check_branch
        %743 = sbr.rel (%p741) target = $region44
      $region43: #{basic_block.4} parent=35 // pred_region
        _
      $region44: #{basic_block.4} parent=35 // pred_fallthru
        _
      // Predicated region
      $region45: #{basic_block.4} parent=35 // pred_check
        %p744 = pneg %p146
      $region46: #{basic_block.4} parent=35 // pred_check_branch
        %746 = sbr.rel (%p744) target = $region48
      $region47: #{basic_block.4} parent=35 // pred_region
        _
      $region48: #{basic_block.4} parent=35 // pred_fallthru
        _
      // Predicated region
      $region49: #{basic_block.4} parent=35 // pred_check
        %p747 = pneg %p167
      $region50: #{basic_block.4} parent=35 // pred_check_branch
        %749 = sbr.rel (%p747) target = $region52
      $region51: #{basic_block.4} parent=35 // pred_region
        _
      $region52: #{basic_block.4} parent=35 // pred_fallthru
        _
      // Predicated region
      $region53: #{basic_block.4} parent=35 // pred_check
        %p750 = pneg %p146
      $region54: #{basic_block.4} parent=35 // pred_check_branch
        %752 = sbr.rel (%p750) target = $region56
      $region55: #{basic_block.4} parent=35 // pred_region
        _
      $region56: #{basic_block.4} parent=35 // pred_fallthru
        _
      // Predicated region
      $region57: #{basic_block.4} parent=35 // pred_check
        %p753 = pneg %p167
      $region58: #{basic_block.4} parent=35 // pred_check_branch
        %755 = sbr.rel (%p753) target = $region60
      $region59: #{basic_block.4} parent=35 // pred_region
        _
      $region60: #{basic_block.4} parent=35 // pred_fallthru
        _
    $region36: #{basic_block.4} parent=5 // pred_fallthru
      _
    %p756 = scmp.le.s32.totalorder 2, %s13
    // Predicated region
    $region61: #{basic_block.4} parent=5 // pred_check
      %p757 = pneg %p756
    $region62: #{basic_block.4} parent=5 // pred_check_branch
      %759 = sbr.rel (%p757) target = $region64
    $region63: #{basic_block.4} parent=5 // pred_region
      %s760 = ssub.s32 %s13, 2
      // Predicated region
      $region65: #{basic_block.4} parent=63 // pred_check
        %p761 = pneg %p131
      $region66: #{basic_block.4} parent=63 // pred_check_branch
        %763 = sbr.rel (%p761) target = $region68
      $region67: #{basic_block.4} parent=63 // pred_region
        %p764 = scmp.lt.s32.totalorder %s19, 1
        %s765 = scalar_select %p764, %s19, 1
        %s766 = smul.addr %s765, 8
        %s767 = smul.addr %s766, 4
        %s768 = scalar_lea.vmem %s4, %s767
      $region68: #{basic_block.4} parent=63 // pred_fallthru
        _
    $region64: #{basic_block.4} parent=5 // pred_fallthru
      _
  $region6: #{basic_block.4} parent=0 // loop_footer
    %s17 = sadd.s32 1, %s13
  $region7: #{basic_block.4} parent=0 // loop_footer_branch
    %12 = sbr.rel target = $region3
  $region8: #{basic_block.4} parent=0 // loop_exit
    _

// kernel: basic_block.3
$region0: #{basic_block.3}
  #allocation0 [shape = 'u32[]', space=smem, size = 0x4, offset = 0x4, fixed_abs, tag = 'smem constant byte address 0x4 - core index']
  #allocation1 [shape = 'u32[144,128]{1,0:T(1,128)}', space=vmem, size = 0x12000, scoped, tag = 'internal scratch']
  %s0 = inlined_call_operand.hbm [shape: f32[2,4,1024], index: 0, kind: input, shape index: {}]
  %s1 = inlined_call_operand.vmem [shape: f32[4,1], index: 1, kind: input, shape index: {}]
  %s2 = inlined_call_operand.vmem [shape: f32[4,1], index: 2, kind: input, shape index: {}]
  %s3 = inlined_call_operand.vmem [shape: bf16[4,12], index: 3, kind: input, shape index: {}]
  %s4 = inlined_call_operand.vmem [shape: f32[2,4,1024], index: 4, kind: output, shape index: {0}]
  %s5 = inlined_call_operand.vmem [shape: f32[4,1], index: 5, kind: output, shape index: {1}]
  %s6 = inlined_call_operand.vmem [shape: f32[4,1], index: 6, kind: output, shape index: {2}]
  %7 = xla_tuple %s4, %s5, %s6
  %s8 = sld [smem:[#allocation0]]
  $region73: #{basic_block.3} parent=0
    _
  %s10 = ssub.s32 1, %s8
  %s11 = scalar_select 0, %s10, %s8
  $region1: #{basic_block.3} parent=0
    #allocation2 [shape = 'u8[32768]{0}', space=vmem, size = 0x8000, scoped, tag = 'input window, operand 0']
    #allocation3 [shape = 's32[2]{0}', space=sflag, size = 0x8, scoped, tag = 'scoped memory for basic_block.3']
    %12 = vsyncpa [#allocation3], 0
    %s13 = scalar_lea.sflag [#allocation3], 1
    %14 = vsyncpa %s13, 0
    loop: start=0, step=1, limit=4
    $region2: #{basic_block.3} parent=1 // loop_pre_header
      _
    $region3: #{basic_block.3} parent=1 // loop_header
      %s16 = sphi 0, %s20
      %p17 = scmp.ge.s32.totalorder %s16, 4
      %s26 = sphi 0, %s28
      %s29 = sphi 0, %s26
      %s30 = sphi 0, %s29
      %s46 = sphi 0, %s30
      %s50 = sphi 0, %s50
      %s52 = sphi 0, %s50
      %s53 = sphi 0, %s52
      %s67 = sphi 0, %s53
      %s71 = sphi 0, %s71
      %s73 = sphi 0, %s71
      %s74 = sphi 0, %s73
      %s88 = sphi 0, %s74
      %s92 = sphi 0, %s92
      %s94 = sphi 0, %s92
      %s95 = sphi 0, %s94
      %s109 = sphi 0, %s95
      %s115 = sphi 0, %s117
      %s118 = sphi 0, %s115
      %s119 = sphi 0, %s118
      %s135 = sphi 0, %s119
      %s139 = sphi 0, %s139
      %s141 = sphi 0, %s139
      %s142 = sphi 0, %s141
      %s156 = sphi 0, %s142
      %s160 = sphi 0, %s160
      %s162 = sphi 0, %s160
      %s163 = sphi 0, %s162
      %s177 = sphi 0, %s163
    $region4: #{basic_block.3} parent=1 // loop_header_branch
      %19 = sbr.rel (%p17) target = $region8
    $region5: #{basic_block.3} parent=1 // loop_body
      %s21 = ssub.s32 %s16, 1
      %s22 = ssub.s32 %s16, 2
      %s23 = sadd.s32 %s16, 1
      %s24 = ssub.s32 %s16, %s23
      %p25 = scmp.eq.s32.totalorder %s24, 0
      %s27 = sadd.s32 %s26, 1
      %s28 = scalar_select %p25, %s26, %s27
      %p31 = pneg %p25
      %p32 = scmp.eq.s32.totalorder %s16, 1
      %p33 = por %p31, %p32
      %p34 = scmp.ne.s32.totalorder %s26, %s29
      %p35 = scmp.eq.s32.totalorder %s16, 0
      %p36 = por %p34, %p35
      %p37 = scmp.ne.s32.totalorder %s26, %s29
      %p38 = scmp.eq.s32.totalorder %s21, 1
      %p39 = por %p37, %p38
      %p40 = scmp.ne.s32.totalorder %s29, %s30
      %p41 = scmp.eq.s32.totalorder %s21, 0
      %p42 = por %p40, %p41
      %p43 = scmp.ne.s32.totalorder %s29, %s30
      %p44 = scmp.eq.s32.totalorder %s22, 1
      %p45 = por %p43, %p44
      %p47 = scmp.ne.s32.totalorder %s30, %s46
      %p48 = scmp.eq.s32.totalorder %s22, 0
      %p49 = por %p47, %p48
      %s51 = sadd.s32 %s50, 1
      %p54 = scmp.eq.s32.totalorder %s16, 1
      %p55 = scmp.ne.s32.totalorder %s50, %s52
      %p56 = scmp.eq.s32.totalorder %s16, 0
      %p57 = por %p55, %p56
      %p58 = scmp.ne.s32.totalorder %s50, %s52
      %p59 = scmp.eq.s32.totalorder %s21, 1
      %p60 = por %p58, %p59
      %p61 = scmp.ne.s32.totalorder %s52, %s53
      %p62 = scmp.eq.s32.totalorder %s21, 0
      %p63 = por %p61, %p62
      %p64 = scmp.ne.s32.totalorder %s52, %s53
      %p65 = scmp.eq.s32.totalorder %s22, 1
      %p66 = por %p64, %p65
      %p68 = scmp.ne.s32.totalorder %s53, %s67
      %p69 = scmp.eq.s32.totalorder %s22, 0
      %p70 = por %p68, %p69
      %s72 = sadd.s32 %s71, 1
      %p75 = scmp.eq.s32.totalorder %s16, 1
      %p76 = scmp.ne.s32.totalorder %s71, %s73
      %p77 = scmp.eq.s32.totalorder %s16, 0
      %p78 = por %p76, %p77
      %p79 = scmp.ne.s32.totalorder %s71, %s73
      %p80 = scmp.eq.s32.totalorder %s21, 1
      %p81 = por %p79, %p80
      %p82 = scmp.ne.s32.totalorder %s73, %s74
      %p83 = scmp.eq.s32.totalorder %s21, 0
      %p84 = por %p82, %p83
      %p85 = scmp.ne.s32.totalorder %s73, %s74
      %p86 = scmp.eq.s32.totalorder %s22, 1
      %p87 = por %p85, %p86
      %p89 = scmp.ne.s32.totalorder %s74, %s88
      %p90 = scmp.eq.s32.totalorder %s22, 0
      %p91 = por %p89, %p90
      %s93 = sadd.s32 %s92, 1
      %p96 = scmp.eq.s32.totalorder %s16, 1
      %p97 = scmp.ne.s32.totalorder %s92, %s94
      %p98 = scmp.eq.s32.totalorder %s16, 0
      %p99 = por %p97, %p98
      %p100 = scmp.ne.s32.totalorder %s92, %s94
      %p101 = scmp.eq.s32.totalorder %s21, 1
      %p102 = por %p100, %p101
      %p103 = scmp.ne.s32.totalorder %s94, %s95
      %p104 = scmp.eq.s32.totalorder %s21, 0
      %p105 = por %p103, %p104
      %p106 = scmp.ne.s32.totalorder %s94, %s95
      %p107 = scmp.eq.s32.totalorder %s22, 1
      %p108 = por %p106, %p107
      %p110 = scmp.ne.s32.totalorder %s95, %s109
      %p111 = scmp.eq.s32.totalorder %s22, 0
      %p112 = por %p110, %p111
      %s113 = ssub.s32 %s16, %s23
      %p114 = scmp.eq.s32.totalorder %s113, 0
      %s116 = sadd.s32 %s115, 1
      %s117 = scalar_select %p114, %s115, %s116
      %p120 = pneg %p114
      %p121 = scmp.eq.s32.totalorder %s16, 1
      %p122 = por %p120, %p121
      %p123 = scmp.ne.s32.totalorder %s115, %s118
      %p124 = scmp.eq.s32.totalorder %s16, 0
      %p125 = por %p123, %p124
      %p126 = scmp.ne.s32.totalorder %s115, %s118
      %p127 = scmp.eq.s32.totalorder %s21, 1
      %p128 = por %p126, %p127
      %p129 = scmp.ne.s32.totalorder %s118, %s119
      %p130 = scmp.eq.s32.totalorder %s21, 0
      %p131 = por %p129, %p130
      %p132 = scmp.ne.s32.totalorder %s118, %s119
      %p133 = scmp.eq.s32.totalorder %s22, 1
      %p134 = por %p132, %p133
      %p136 = scmp.ne.s32.totalorder %s119, %s135
      %p137 = scmp.eq.s32.totalorder %s22, 0
      %p138 = por %p136, %p137
      %s140 = sadd.s32 %s139, 1
      %p143 = scmp.eq.s32.totalorder %s16, 1
      %p144 = scmp.ne.s32.totalorder %s139, %s141
      %p145 = scmp.eq.s32.totalorder %s16, 0
      %p146 = por %p144, %p145
      %p147 = scmp.ne.s32.totalorder %s139, %s141
      %p148 = scmp.eq.s32.totalorder %s21, 1
      %p149 = por %p147, %p148
      %p150 = scmp.ne.s32.totalorder %s141, %s142
      %p151 = scmp.eq.s32.totalorder %s21, 0
      %p152 = por %p150, %p151
      %p153 = scmp.ne.s32.totalorder %s141, %s142
      %p154 = scmp.eq.s32.totalorder %s22, 1
      %p155 = por %p153, %p154
      %p157 = scmp.ne.s32.totalorder %s142, %s156
      %p158 = scmp.eq.s32.totalorder %s22, 0
      %p159 = por %p157, %p158
      %s161 = sadd.s32 %s160, 1
      %p164 = scmp.eq.s32.totalorder %s16, 1
      %p165 = scmp.ne.s32.totalorder %s160, %s162
      %p166 = scmp.eq.s32.totalorder %s16, 0
      %p167 = por %p165, %p166
      %p168 = scmp.ne.s32.totalorder %s160, %s162
      %p169 = scmp.eq.s32.totalorder %s21, 1
      %p170 = por %p168, %p169
      %p171 = scmp.ne.s32.totalorder %s162, %s163
      %p172 = scmp.eq.s32.totalorder %s21, 0
      %p173 = por %p171, %p172
      %p174 = scmp.ne.s32.totalorder %s162, %s163
      %p175 = scmp.eq.s32.totalorder %s22, 1
      %p176 = por %p174, %p175
      %p178 = scmp.ne.s32.totalorder %s163, %s177
      %p179 = scmp.eq.s32.totalorder %s22, 0
      %p180 = por %p178, %p179
      %p181 = scmp.le.s32.totalorder 1, %s16
      %p182 = scmp.lt.s32.totalorder %s16, 3
      %p183 = pnand %p181, %p182
      %p184 = pneg %p183
      // Predicated region
      $region9: #{basic_block.3} parent=5 // pred_check
        _
      $region10: #{basic_block.3} parent=5 // pred_check_branch
        %186 = sbr.rel (%p183) target = $region12
      $region11: #{basic_block.3} parent=5 // pred_region
        %s187 = ssub.s32 %s16, 1
        // Predicated region
        $region13: #{basic_block.3} parent=11 // pred_check
          %p188 = pneg %p63
        $region14: #{basic_block.3} parent=11 // pred_check_branch
          %190 = sbr.rel (%p188) target = $region16
        $region15: #{basic_block.3} parent=11 // pred_region
          _
        $region16: #{basic_block.3} parent=11 // pred_fallthru
          _
        // Predicated region
        $region17: #{basic_block.3} parent=11 // pred_check
          %p191 = pneg %p84
        $region18: #{basic_block.3} parent=11 // pred_check_branch
          %193 = sbr.rel (%p191) target = $region20
        $region19: #{basic_block.3} parent=11 // pred_region
          _
        $region20: #{basic_block.3} parent=11 // pred_fallthru
          _
        // Predicated region
        $region21: #{basic_block.3} parent=11 // pred_check
          %p194 = pneg %p105
        $region22: #{basic_block.3} parent=11 // pred_check_branch
          %196 = sbr.rel (%p194) target = $region24
        $region23: #{basic_block.3} parent=11 // pred_region
          _
        $region24: #{basic_block.3} parent=11 // pred_fallthru
          _
      $region12: #{basic_block.3} parent=5 // pred_fallthru
        _
      %p197 = scmp.lt.s32.totalorder %s16, 2
      // Predicated region
      $region25: #{basic_block.3} parent=5 // pred_check
        %p198 = pneg %p197
      $region26: #{basic_block.3} parent=5 // pred_check_branch
        %200 = sbr.rel (%p198) target = $region28
      $region27: #{basic_block.3} parent=5 // pred_region
        // Predicated region
        $region29: #{basic_block.3} parent=27 // pred_check
          %p201 = pneg %p36
        $region30: #{basic_block.3} parent=27 // pred_check_branch
          %203 = sbr.rel (%p201) target = $region32
        $region31: #{basic_block.3} parent=27 // pred_region
          %s204 = sand.u32 %s26, 1
          %s205 = scalar_lea.sflag [#allocation3], %s204
          %s206 = sand.u32 %s26, 1
          %s207 = smul.addr %s206, 32
          %s208 = scalar_lea.vmem [#allocation2], %s207
          %s210 = ssub.s32 512, 512
          %211 = vsyncadd %s205, %s210
          %s212 = smul.addr %s16, 8
          %s213 = smul.addr %s212, 64
          %s214 = scalar_lea.hbm %s0, %s213
          %s216 = sshll.u32 %s208, 4
          %s217 = int_to_ptr.vmem [resolvable:$true] %s216
          %219 = dma.hbm_to_vmem [thread:$0]  %s214, 512, %s217, %s205
        $region32: #{basic_block.3} parent=27 // pred_fallthru
          _
      $region28: #{basic_block.3} parent=5 // pred_fallthru
        _
      %p220 = scmp.le.s32.totalorder 1, %s16
      %p221 = scmp.lt.s32.totalorder %s16, 3
      %p222 = pnand %p220, %p221
      %p223 = pneg %p222
      // Predicated region
      $region33: #{basic_block.3} parent=5 // pred_check
        _
      $region34: #{basic_block.3} parent=5 // pred_check_branch
        %225 = sbr.rel (%p222) target = $region36
      $region35: #{basic_block.3} parent=5 // pred_region
        %s226 = ssub.s32 %s16, 1
        %s227 = sand.u32 %s29, 1
        %s228 = scalar_lea.sflag [#allocation3], %s227
        %s229 = sand.u32 %s29, 1
        %s230 = smul.addr %s229, 32
        %s231 = scalar_lea.vmem [#allocation2], %s230
        // Predicated region
        $region37: #{basic_block.3} parent=35 // pred_check
          %p232 = pneg %p42
        $region38: #{basic_block.3} parent=35 // pred_check_branch
          %234 = sbr.rel (%p232) target = $region40
        $region39: #{basic_block.3} parent=35 // pred_region
          %235 = dma.done %s228, 512
        $region40: #{basic_block.3} parent=35 // pred_fallthru
          _
        %s236 = sand.u32 %s29, 1
        %s237 = scalar_lea.sflag [#allocation3], %s236
        %s238 = sand.u32 %s29, 1
        %s239 = smul.addr %s238, 32
        %s240 = scalar_lea.vmem [#allocation2], %s239
        %p241 = pneg %p42
        %p242 = pneg %p39
        %p243 = pneg %p63
        %p244 = pneg %p60
        %p245 = pneg %p84
        %p246 = pneg %p81
        %p247 = pneg %p105
        %p248 = pneg %p102
        %p249 = pneg %p131
        %p250 = pneg %p128
        %p251 = scmp.lt.s32.totalorder %s21, 1
        %s252 = scalar_select %p251, %s21, 1
        %s253 = smul.addr %s252, 8
        %s254 = smul.addr %s253, 4
        %s255 = scalar_lea.vmem %s4, %s254
        %p256 = pneg %p152
        %p257 = pneg %p149
        %p258 = pneg %p173
        %p259 = pneg %p170
        %p260 = scmp.lt.s32.totalorder %s21, 1
        %s261 = scalar_select %p260, %s21, 1
        %s262 = smul.addr %s261, 8
        %s263 = smul.addr %s262, 4
        %s264 = scalar_lea.vmem %s4, %s263
        %v266 = vld [vmem:[%s231] sm:$0xff]
        %v267 = vld [vmem:[%s231 + $0x8] sm:$0xff]
        %v268 = vld [vmem:[%s231 + $0x10] sm:$0xff]
        %v269 = vld [vmem:[%s231 + $0x18] sm:$0xff]
        %v270 = vlaneseq
        %v271 = vand.u32 %v270, 127
        %v272 = vadd.s32 %v271, 128
        %v273 = vadd.s32 %v271, 256
        %v274 = vadd.s32 %v271, 384
        %v275 = vadd.s32 %v271, 512
        %v276 = vadd.s32 %v271, 640
        %v277 = vadd.s32 %v271, 768
        %v278 = vadd.s32 %v271, 896
        %v283 = vcombine.high %v266, %v266
        %v284 = vcombine.high %v267, %v267
        %v285 = vcombine.high %v268, %v268
        %v286 = vcombine.high %v269, %v269
        %291 = vrot.lane.b32.xlu0 %v266, 1
        %v292 = vpop.permute.xlu0 %291
        %293 = vrot.lane.b32.xlu0 %v283, 1
        %v294 = vpop.permute.xlu0 %293
        %295 = vrot.lane.b32.xlu0 %v267, 1
        %v296 = vpop.permute.xlu0 %295
        %297 = vrot.lane.b32.xlu0 %v284, 1
        %v298 = vpop.permute.xlu0 %297
        %299 = vrot.lane.b32.xlu0 %v268, 1
        %v300 = vpop.permute.xlu0 %299
        %301 = vrot.lane.b32.xlu0 %v285, 1
        %v302 = vpop.permute.xlu0 %301
        %303 = vrot.lane.b32.xlu0 %v269, 1
        %v304 = vpop.permute.xlu0 %303
        %305 = vrot.lane.b32.xlu0 %v286, 1
        %v306 = vpop.permute.xlu0 %305
        %vm307 = vcmp.lt.s32.totalorder %v271, 1
        %v308 = vsel %vm307, %v304, %v306
        %v309 = vsel %vm307, %v302, %v304
        %v310 = vsel %vm307, %v300, %v302
        %v311 = vsel %vm307, %v298, %v300
        %v312 = vsel %vm307, %v296, %v298
        %v313 = vsel %vm307, %v294, %v296
        %v314 = vsel %vm307, %v292, %v294
        %v315 = vsel %vm307, %v306, %v292
        %v316 = vadd.s32 %v271, 4294967295
        %v317 = vadd.s32 %v272, 4294967295
        %v318 = vadd.s32 %v273, 4294967295
        %v319 = vadd.s32 %v274, 4294967295
        %v320 = vadd.s32 %v275, 4294967295
        %v321 = vadd.s32 %v276, 4294967295
        %v322 = vadd.s32 %v277, 4294967295
        %v323 = vadd.s32 %v278, 4294967295
        %vm324 = vcmp.ge.s32.totalorder %v316, 0
        %vm325 = vcmp.ge.s32.totalorder %v317, 0
        %vm326 = vcmp.ge.s32.totalorder %v318, 0
        %vm327 = vcmp.ge.s32.totalorder %v319, 0
        %vm328 = vcmp.ge.s32.totalorder %v320, 0
        %vm329 = vcmp.ge.s32.totalorder %v321, 0
        %vm330 = vcmp.ge.s32.totalorder %v322, 0
        %vm331 = vcmp.ge.s32.totalorder %v323, 0
        %vm332 = vcmp.lt.s32.totalorder %v316, 1024
        %vm333 = vcmp.lt.s32.totalorder %v317, 1024
        %vm334 = vcmp.lt.s32.totalorder %v318, 1024
        %vm335 = vcmp.lt.s32.totalorder %v319, 1024
        %vm336 = vcmp.lt.s32.totalorder %v320, 1024
        %vm337 = vcmp.lt.s32.totalorder %v321, 1024
        %vm338 = vcmp.lt.s32.totalorder %v322, 1024
        %vm339 = vcmp.lt.s32.totalorder %v323, 1024
        %vm340 = vmand %vm324, %vm332
        %vm341 = vmand %vm325, %vm333
        %vm342 = vmand %vm326, %vm334
        %vm343 = vmand %vm327, %vm335
        %vm344 = vmand %vm328, %vm336
        %vm345 = vmand %vm329, %vm337
        %vm346 = vmand %vm330, %vm338
        %vm347 = vmand %vm331, %vm339
        %v348 = vsel %vm340, %v315, 0.0
        %v349 = vsel %vm341, %v314, 0.0
        %v350 = vsel %vm342, %v313, 0.0
        %v351 = vsel %vm343, %v312, 0.0
        %v352 = vsel %vm344, %v311, 0.0
        %v353 = vsel %vm345, %v310, 0.0
        %v354 = vsel %vm346, %v309, 0.0
        %v355 = vsel %vm347, %v308, 0.0
        %356 = vrot.lane.b32.xlu0 %v266, 127
        %v357 = vpop.permute.xlu0 %356
        %358 = vrot.lane.b32.xlu0 %v283, 127
        %v359 = vpop.permute.xlu0 %358
        %360 = vrot.lane.b32.xlu0 %v267, 127
        %v361 = vpop.permute.xlu0 %360
        %362 = vrot.lane.b32.xlu0 %v284, 127
        %v363 = vpop.permute.xlu0 %362
        %364 = vrot.lane.b32.xlu0 %v268, 127
        %v365 = vpop.permute.xlu0 %364
        %366 = vrot.lane.b32.xlu0 %v285, 127
        %v367 = vpop.permute.xlu0 %366
        %368 = vrot.lane.b32.xlu0 %v269, 127
        %v369 = vpop.permute.xlu0 %368
        %370 = vrot.lane.b32.xlu0 %v286, 127
        %v371 = vpop.permute.xlu0 %370
        %vm372 = vcmp.lt.s32.totalorder %v271, 127
        %v373 = vsel %vm372, %v369, %v371
        %v374 = vsel %vm372, %v367, %v369
        %v375 = vsel %vm372, %v365, %v367
        %v376 = vsel %vm372, %v363, %v365
        %v377 = vsel %vm372, %v361, %v363
        %v378 = vsel %vm372, %v359, %v361
        %v379 = vsel %vm372, %v357, %v359
        %v380 = vsel %vm372, %v371, %v357
        %v381 = vadd.s32 %v271, 1
        %v382 = vadd.s32 %v272, 1
        %v383 = vadd.s32 %v273, 1
        %v384 = vadd.s32 %v274, 1
        %v385 = vadd.s32 %v275, 1
        %v386 = vadd.s32 %v276, 1
        %v387 = vadd.s32 %v277, 1
        %v388 = vadd.s32 %v278, 1
        %vm389 = vcmp.ge.s32.totalorder %v381, 0
        %vm390 = vcmp.ge.s32.totalorder %v382, 0
        %vm391 = vcmp.ge.s32.totalorder %v383, 0
        %vm392 = vcmp.ge.s32.totalorder %v384, 0
        %vm393 = vcmp.ge.s32.totalorder %v385, 0
        %vm394 = vcmp.ge.s32.totalorder %v386, 0
        %vm395 = vcmp.ge.s32.totalorder %v387, 0
        %vm396 = vcmp.ge.s32.totalorder %v388, 0
        %vm397 = vcmp.lt.s32.totalorder %v381, 1024
        %vm398 = vcmp.lt.s32.totalorder %v382, 1024
        %vm399 = vcmp.lt.s32.totalorder %v383, 1024
        %vm400 = vcmp.lt.s32.totalorder %v384, 1024
        %vm401 = vcmp.lt.s32.totalorder %v385, 1024
        %vm402 = vcmp.lt.s32.totalorder %v386, 1024
        %vm403 = vcmp.lt.s32.totalorder %v387, 1024
        %vm404 = vcmp.lt.s32.totalorder %v388, 1024
        %vm405 = vmand %vm389, %vm397
        %vm406 = vmand %vm390, %vm398
        %vm407 = vmand %vm391, %vm399
        %vm408 = vmand %vm392, %vm400
        %vm409 = vmand %vm393, %vm401
        %vm410 = vmand %vm394, %vm402
        %vm411 = vmand %vm395, %vm403
        %vm412 = vmand %vm396, %vm404
        %v413 = vsel %vm405, %v379, 0.0
        %v414 = vsel %vm406, %v378, 0.0
        %v415 = vsel %vm407, %v377, 0.0
        %v416 = vsel %vm408, %v376, 0.0
        %v417 = vsel %vm409, %v375, 0.0
        %v418 = vsel %vm410, %v374, 0.0
        %v419 = vsel %vm411, %v373, 0.0
        %v420 = vsel %vm412, %v380, 0.0
        %v421 = vcombine.low %v266, %v266
        %v422 = vcombine.low %v267, %v267
        %v423 = vcombine.low %v268, %v268
        %v424 = vcombine.low %v269, %v269
        %vm429 = vcmask 1043456
        %v430 = vsel %vm429, %v348, %v421
        %v431 = vsel %vm429, %v349, %v266
        %v432 = vsel %vm429, %v350, %v422
        %v433 = vsel %vm429, %v351, %v267
        %v434 = vsel %vm429, %v352, %v423
        %v435 = vsel %vm429, %v353, %v268
        %v436 = vsel %vm429, %v354, %v424
        %v437 = vsel %vm429, %v355, %v269
        %v438 = vpack.c.bf16 %v413, %v430
        %v439 = vpack.c.bf16 %v414, %v431
        %v440 = vpack.c.bf16 %v415, %v432
        %v441 = vpack.c.bf16 %v416, %v433
        %v442 = vpack.c.bf16 %v417, %v434
        %v443 = vpack.c.bf16 %v418, %v435
        %v444 = vpack.c.bf16 %v419, %v436
        %v445 = vpack.c.bf16 %v420, %v437
        %v446 = vld [vmem:[%s3] sm:$0x3]
        %vm447 = vcmask 97280
        %v449 = vsel %vm447, %v446, 0
        %vm451 = vcmask 1045504
        %v453 = vsel %vm451, %v438, 0
        %v456 = vsel %vm451, %v439, 0
        %v459 = vsel %vm451, %v440, 0
        %v462 = vsel %vm451, %v441, 0
        %v465 = vsel %vm451, %v442, 0
        %v468 = vsel %vm451, %v443, 0
        %v471 = vsel %vm451, %v444, 0
        %v474 = vsel %vm451, %v445, 0
        %476 = vmatprep.subr.bf16.mxu0 0
        %477 = vmatpush1.bf16.msra.mxu0 0
        %478 = vmatprep.subr.bf16.mxu0 0
        %479 = vmatpush1.bf16.msra.mxu0 0
        %480 = vmatprep.subr.bf16.mxu0 0
        %481 = vmatpush1.bf16.msra.mxu0 0
        %482 = vmatprep.subr.bf16.mxu0 0
        %483 = vmatpush1.bf16.msra.mxu0 0
        %484 = vmatprep.subr.bf16.mxu0 0
        %485 = vmatpush1.bf16.msra.mxu0 0
        %486 = vmatprep.subr.bf16.mxu0 0
        %487 = vmatpush1.bf16.msra.mxu0 0
        %488 = vmatprep.subr.bf16.mxu0 0
        %489 = vmatpush1.bf16.msra.mxu0 0
        %490 = vmatprep.subr.bf16.mxu0 %v456
        %491 = vmatpush1.bf16.msra.mxu0 %v453
        %492 = vmatprep.subr.bf16.mxu0 0
        %493 = vmatpush2.bf16.msra.mxu0 0
        %494 = vmatprep.subr.bf16.mxu0 0
        %495 = vmatpush2.bf16.msra.mxu0 0
        %496 = vmatprep.subr.bf16.mxu0 0
        %497 = vmatpush2.bf16.msra.mxu0 0
        %498 = vmatprep.subr.bf16.mxu0 0
        %499 = vmatpush2.bf16.msra.mxu0 0
        %500 = vmatprep.subr.bf16.mxu0 0
        %501 = vmatpush2.bf16.msra.mxu0 0
        %502 = vmatprep.subr.bf16.mxu0 0
        %503 = vmatpush2.bf16.msra.mxu0 0
        %504 = vmatprep.subr.bf16.mxu0 0
        %505 = vmatpush2.bf16.msra.mxu0 0
        %506 = vmatprep.subr.bf16.mxu0 0
        %507 = vmatpush2.bf16.msra.mxu0 0
        %508 = vmatprep.mubr.bf16.mxu0 0
        %509 = vmatmul.mubr.bf16.gmra.mxu0 %v449
        %v510 = vpop.f32.mrf.mxu0
        %v511 = vadd.f32 0.0, %v510
        %v512 = vpop.f32.mrf.mxu0
        %v513 = vadd.f32 0.0, %v512
        %v514 = vpop.f32.mrf.mxu0
        %v515 = vpop.f32.mrf.mxu0
        %516 = vdwg.mxu0
        %517 = vmatprep.subr.bf16.mxu0 0
        %518 = vmatpush1.bf16.msra.mxu0 0
        %519 = vmatprep.subr.bf16.mxu0 0
        %520 = vmatpush1.bf16.msra.mxu0 0
        %521 = vmatprep.subr.bf16.mxu0 0
        %522 = vmatpush1.bf16.msra.mxu0 0
        %523 = vmatprep.subr.bf16.mxu0 0
        %524 = vmatpush1.bf16.msra.mxu0 0
        %525 = vmatprep.subr.bf16.mxu0 0
        %526 = vmatpush1.bf16.msra.mxu0 0
        %527 = vmatprep.subr.bf16.mxu0 0
        %528 = vmatpush1.bf16.msra.mxu0 0
        %529 = vmatprep.subr.bf16.mxu0 0
        %530 = vmatpush1.bf16.msra.mxu0 0
        %531 = vmatprep.subr.bf16.mxu0 %v462
        %532 = vmatpush1.bf16.msra.mxu0 %v459
        %533 = vmatprep.subr.bf16.mxu0 0
        %534 = vmatpush2.bf16.msra.mxu0 0
        %535 = vmatprep.subr.bf16.mxu0 0
        %536 = vmatpush2.bf16.msra.mxu0 0
        %537 = vmatprep.subr.bf16.mxu0 0
        %538 = vmatpush2.bf16.msra.mxu0 0
        %539 = vmatprep.subr.bf16.mxu0 0
        %540 = vmatpush2.bf16.msra.mxu0 0
        %541 = vmatprep.subr.bf16.mxu0 0
        %542 = vmatpush2.bf16.msra.mxu0 0
        %543 = vmatprep.subr.bf16.mxu0 0
        %544 = vmatpush2.bf16.msra.mxu0 0
        %545 = vmatprep.subr.bf16.mxu0 0
        %546 = vmatpush2.bf16.msra.mxu0 0
        %547 = vmatprep.subr.bf16.mxu0 0
        %548 = vmatpush2.bf16.msra.mxu0 0
        %549 = vmatprep.mubr.bf16.mxu0 0
        %550 = vmatmul.mubr.bf16.gmra.mxu0 %v449
        %v551 = vpop.f32.mrf.mxu0
        %v552 = vadd.f32 0.0, %v551
        %v553 = vpop.f32.mrf.mxu0
        %v554 = vadd.f32 0.0, %v553
        %v555 = vpop.f32.mrf.mxu0
        %v556 = vpop.f32.mrf.mxu0
        %557 = vdwg.mxu0
        %558 = vmatprep.subr.bf16.mxu0 0
        %559 = vmatpush1.bf16.msra.mxu0 0
        %560 = vmatprep.subr.bf16.mxu0 0
        %561 = vmatpush1.bf16.msra.mxu0 0
        %562 = vmatprep.subr.bf16.mxu0 0
        %563 = vmatpush1.bf16.msra.mxu0 0
        %564 = vmatprep.subr.bf16.mxu0 0
        %565 = vmatpush1.bf16.msra.mxu0 0
        %566 = vmatprep.subr.bf16.mxu0 0
        %567 = vmatpush1.bf16.msra.mxu0 0
        %568 = vmatprep.subr.bf16.mxu0 0
        %569 = vmatpush1.bf16.msra.mxu0 0
        %570 = vmatprep.subr.bf16.mxu0 0
        %571 = vmatpush1.bf16.msra.mxu0 0
        %572 = vmatprep.subr.bf16.mxu0 %v468
        %573 = vmatpush1.bf16.msra.mxu0 %v465
        %574 = vmatprep.subr.bf16.mxu0 0
        %575 = vmatpush2.bf16.msra.mxu0 0
        %576 = vmatprep.subr.bf16.mxu0 0
        %577 = vmatpush2.bf16.msra.mxu0 0
        %578 = vmatprep.subr.bf16.mxu0 0
        %579 = vmatpush2.bf16.msra.mxu0 0
        %580 = vmatprep.subr.bf16.mxu0 0
        %581 = vmatpush2.bf16.msra.mxu0 0
        %582 = vmatprep.subr.bf16.mxu0 0
        %583 = vmatpush2.bf16.msra.mxu0 0
        %584 = vmatprep.subr.bf16.mxu0 0
        %585 = vmatpush2.bf16.msra.mxu0 0
        %586 = vmatprep.subr.bf16.mxu0 0
        %587 = vmatpush2.bf16.msra.mxu0 0
        %588 = vmatprep.subr.bf16.mxu0 0
        %589 = vmatpush2.bf16.msra.mxu0 0
        %590 = vmatprep.mubr.bf16.mxu0 0
        %591 = vmatmul.mubr.bf16.gmra.mxu0 %v449
        %v592 = vpop.f32.mrf.mxu0
        %v593 = vadd.f32 0.0, %v592
        %v594 = vpop.f32.mrf.mxu0
        %v595 = vadd.f32 0.0, %v594
        %v596 = vpop.f32.mrf.mxu0
        %v597 = vpop.f32.mrf.mxu0
        %598 = vdwg.mxu0
        %599 = vmatprep.subr.bf16.mxu0 0
        %600 = vmatpush1.bf16.msra.mxu0 0
        %601 = vmatprep.subr.bf16.mxu0 0
        %602 = vmatpush1.bf16.msra.mxu0 0
        %603 = vmatprep.subr.bf16.mxu0 0
        %604 = vmatpush1.bf16.msra.mxu0 0
        %605 = vmatprep.subr.bf16.mxu0 0
        %606 = vmatpush1.bf16.msra.mxu0 0
        %607 = vmatprep.subr.bf16.mxu0 0
        %608 = vmatpush1.bf16.msra.mxu0 0
        %609 = vmatprep.subr.bf16.mxu0 0
        %610 = vmatpush1.bf16.msra.mxu0 0
        %611 = vmatprep.subr.bf16.mxu0 0
        %612 = vmatpush1.bf16.msra.mxu0 0
        %613 = vmatprep.subr.bf16.mxu0 %v474
        %614 = vmatpush1.bf16.msra.mxu0 %v471
        %615 = vmatprep.subr.bf16.mxu0 0
        %616 = vmatpush2.bf16.msra.mxu0 0
        %617 = vmatprep.subr.bf16.mxu0 0
        %618 = vmatpush2.bf16.msra.mxu0 0
        %619 = vmatprep.subr.bf16.mxu0 0
        %620 = vmatpush2.bf16.msra.mxu0 0
        %621 = vmatprep.subr.bf16.mxu0 0
        %622 = vmatpush2.bf16.msra.mxu0 0
        %623 = vmatprep.subr.bf16.mxu0 0
        %624 = vmatpush2.bf16.msra.mxu0 0
        %625 = vmatprep.subr.bf16.mxu0 0
        %626 = vmatpush2.bf16.msra.mxu0 0
        %627 = vmatprep.subr.bf16.mxu0 0
        %628 = vmatpush2.bf16.msra.mxu0 0
        %629 = vmatprep.subr.bf16.mxu0 0
        %630 = vmatpush2.bf16.msra.mxu0 0
        %631 = vmatprep.mubr.bf16.mxu0 0
        %632 = vmatmul.mubr.bf16.gmra.mxu0 %v449
        %v633 = vpop.f32.mrf.mxu0
        %v634 = vadd.f32 0.0, %v633
        %v635 = vpop.f32.mrf.mxu0
        %v636 = vadd.f32 0.0, %v635
        %v637 = vpop.f32.mrf.mxu0
        %v638 = vpop.f32.mrf.mxu0
        %639 = vdwg.mxu0
        %v648 = vcombine.low %v511, %v513
        %v649 = vcombine.low %v552, %v554
        %v650 = vcombine.low %v593, %v595
        %v651 = vcombine.low %v634, %v636
        %656 = vst [vmem:[%s264] sm:$0xff] %v648
        %657 = vst [vmem:[%s264 + $0x8] sm:$0xff] %v649
        %658 = vst [vmem:[%s264 + $0x10] sm:$0xff] %v650
        %659 = vst [vmem:[%s264 + $0x18] sm:$0xff] %v651
        %p660 = scmp.eq.s32.totalorder %s21, 0
        // Predicated region
        $region41: #{basic_block.3} parent=35 // pred_check
          %p661 = pneg %p660
        $region42: #{basic_block.3} parent=35 // pred_check_branch
          %663 = sbr.rel (%p661) target = $region44
        $region43: #{basic_block.3} parent=35 // pred_region
          %vm664 = vcmask 3072
          %665 = vst.msk [vmem:[%s5] sm:$0xf] %vm664, 0.0
          %666 = vst.msk [vmem:[%s6] sm:$0xf] %vm664, 0.0
        $region44: #{basic_block.3} parent=35 // pred_fallthru
          _
        %v667 = vld [vmem:[%s5] sm:$0xf]
        %v668 = vsel %vm429, %v511, 0.0
        %v669 = vsel %vm429, %v513, 0.0
        %v670 = vadd.f32 %v668, %v669
        %v671 = vsel %vm429, %v552, 0.0
        %v672 = vadd.f32 %v670, %v671
        %v673 = vsel %vm429, %v554, 0.0
        %v674 = vadd.f32 %v672, %v673
        %v675 = vsel %vm429, %v593, 0.0
        %v676 = vadd.f32 %v674, %v675
        %v677 = vsel %vm429, %v595, 0.0
        %v678 = vadd.f32 %v676, %v677
        %v679 = vsel %vm429, %v634, 0.0
        %v680 = vadd.f32 %v678, %v679
        %v681 = vsel %vm429, %v636, 0.0
        %v682 = vadd.f32 %v680, %v681
        %683 = vadd.xlane.f32.xlu0 %v682
        %v684 = vpop.xlane.xlu0 %683
        %v685 = vadd.f32 %v667, %v684
        %vm686 = vcmask 3072
        %687 = vst.msk [vmem:[%s5] sm:$0xf] %vm686, %v685
        %v688 = vld [vmem:[%s6] sm:$0xf]
        %v689 = vmul.f32 %v511, %v511
        %v690 = vmul.f32 %v513, %v513
        %v691 = vmul.f32 %v552, %v552
        %v692 = vmul.f32 %v554, %v554
        %v693 = vmul.f32 %v593, %v593
        %v694 = vmul.f32 %v595, %v595
        %v695 = vmul.f32 %v634, %v634
        %v696 = vmul.f32 %v636, %v636
        %v697 = vsel %vm429, %v689, 0.0
        %v698 = vsel %vm429, %v690, 0.0
        %v699 = vadd.f32 %v697, %v698
        %v700 = vsel %vm429, %v691, 0.0
        %v701 = vadd.f32 %v699, %v700
        %v702 = vsel %vm429, %v692, 0.0
        %v703 = vadd.f32 %v701, %v702
        %v704 = vsel %vm429, %v693, 0.0
        %v705 = vadd.f32 %v703, %v704
        %v706 = vsel %vm429, %v694, 0.0
        %v707 = vadd.f32 %v705, %v706
        %v708 = vsel %vm429, %v695, 0.0
        %v709 = vadd.f32 %v707, %v708
        %v710 = vsel %vm429, %v696, 0.0
        %v711 = vadd.f32 %v709, %v710
        %712 = vadd.xlane.f32.xlu0 %v711
        %v713 = vpop.xlane.xlu0 %712
        %v714 = vadd.f32 %v688, %v713
        %715 = vst.msk [vmem:[%s6] sm:$0xf] %vm686, %v714
        %p716 = scmp.lt.s32.totalorder %s21, 1
        %s717 = scalar_select %p716, %s21, 1
        %s718 = smul.addr %s717, 8
        %s719 = smul.addr %s718, 4
        %s720 = scalar_lea.vmem %s4, %s719
        // Predicated region
        $region45: #{basic_block.3} parent=35 // pred_check
          %p721 = pneg %p128
        $region46: #{basic_block.3} parent=35 // pred_check_branch
          %723 = sbr.rel (%p721) target = $region48
        $region47: #{basic_block.3} parent=35 // pred_region
          _
        $region48: #{basic_block.3} parent=35 // pred_fallthru
          _
        // Predicated region
        $region49: #{basic_block.3} parent=35 // pred_check
          %p724 = pneg %p149
        $region50: #{basic_block.3} parent=35 // pred_check_branch
          %726 = sbr.rel (%p724) target = $region52
        $region51: #{basic_block.3} parent=35 // pred_region
          _
        $region52: #{basic_block.3} parent=35 // pred_fallthru
          _
        // Predicated region
        $region53: #{basic_block.3} parent=35 // pred_check
          %p727 = pneg %p170
        $region54: #{basic_block.3} parent=35 // pred_check_branch
          %729 = sbr.rel (%p727) target = $region56
        $region55: #{basic_block.3} parent=35 // pred_region
          _
        $region56: #{basic_block.3} parent=35 // pred_fallthru
          _
        // Predicated region
        $region57: #{basic_block.3} parent=35 // pred_check
          %p730 = pneg %p149
        $region58: #{basic_block.3} parent=35 // pred_check_branch
          %732 = sbr.rel (%p730) target = $region60
        $region59: #{basic_block.3} parent=35 // pred_region
          _
        $region60: #{basic_block.3} parent=35 // pred_fallthru
          _
        // Predicated region
        $region61: #{basic_block.3} parent=35 // pred_check
          %p733 = pneg %p170
        $region62: #{basic_block.3} parent=35 // pred_check_branch
          %735 = sbr.rel (%p733) target = $region64
        $region63: #{basic_block.3} parent=35 // pred_region
          _
        $region64: #{basic_block.3} parent=35 // pred_fallthru
          _
      $region36: #{basic_block.3} parent=5 // pred_fallthru
        _
      %p736 = scmp.le.s32.totalorder 2, %s16
      // Predicated region
      $region65: #{basic_block.3} parent=5 // pred_check
        %p737 = pneg %p736
      $region66: #{basic_block.3} parent=5 // pred_check_branch
        %739 = sbr.rel (%p737) target = $region68
      $region67: #{basic_block.3} parent=5 // pred_region
        %s740 = ssub.s32 %s16, 2
        // Predicated region
        $region69: #{basic_block.3} parent=67 // pred_check
          %p741 = pneg %p134
        $region70: #{basic_block.3} parent=67 // pred_check_branch
          %743 = sbr.rel (%p741) target = $region72
        $region71: #{basic_block.3} parent=67 // pred_region
          %p744 = scmp.lt.s32.totalorder %s22, 1
          %s745 = scalar_select %p744, %s22, 1
          %s746 = smul.addr %s745, 8
          %s747 = smul.addr %s746, 4
          %s748 = scalar_lea.vmem %s4, %s747
        $region72: #{basic_block.3} parent=67 // pred_fallthru
          _
      $region68: #{basic_block.3} parent=5 // pred_fallthru
        _
    $region6: #{basic_block.3} parent=1 // loop_footer
      %s20 = sadd.s32 1, %s16
    $region7: #{basic_block.3} parent=1 // loop_footer_branch
      %15 = sbr.rel target = $region3
    $region8: #{basic_block.3} parent=1 // loop_exit
      _
    %749 = vsyncpa [#allocation3], 1
    %s750 = scalar_lea.sflag [#allocation3], 1
    %751 = vsyncpa %s750, 1

</llo_original>
